<compile_context>
chip_gen: v6e
topology: v6e:2x2x1
jax: 0.10.0
libtpu: 0.0.40
codegen_flags: <defaults>
</compile_context>

<pallas_src>
import jax
import jax.numpy as jnp
from jax import lax
from jax.experimental import pallas as pl
from jax.experimental.pallas import tpu as pltpu
import numpy as np

NUM_GROUPS = 8
EPS = 1e-5
LANE = 128


def _round_up(x, m):
    return (x + m - 1) // m * m


def _chip_info():
    """(num_tensorcores, vmem_bytes) best-effort from device_kind; conservative default."""
    try:
        kind = jax.devices()[0].device_kind.lower()
    except Exception:
        kind = ""
    if "v5 lite" in kind or "v5e" in kind or "v6" in kind:
        return 1, 128 * 1024 * 1024        # single TC, 128 MiB VMEM (v5e / v6e)
    if "v7" in kind:
        return 2, 64 * 1024 * 1024         # 2 TCs/chip, 64 MiB VMEM per TC (v7x)
    return 2, 64 * 1024 * 1024             # unknown: conservative


def _choose_block_batch(B, L, bytes_per_row, num_cores, vmem_bytes):
    """Pick bt (a divisor of B): rows per step = bt*L, bounded by a VMEM budget."""
    budget_rows = max(L, (vmem_bytes // 4) // max(bytes_per_row, 1))
    divisors = [d for d in range(1, B + 1) if B % d == 0]
    fitting = [d for d in divisors if d * L <= budget_rows]
    if not fitting:
        # TODO(synk): a single sample (L rows) already exceeds the VMEM budget; an
        # L-tiled two-pass GroupNorm would be needed to split further.
        return 1
    if num_cores <= 1:
        return max(fitting)                # v5e/v6e: fewest grid steps possible
    # v7x-style: prefer >= 2 steps per TensorCore so double-buffering can overlap DMA
    for want_steps in (2 * num_cores, num_cores, 1):
        cand = [d for d in fitting if B // d >= want_steps]
        if cand:
            pref = [d for d in cand if d * L >= 128]   # MXU-friendly row count
            return max(pref) if pref else max(cand)
    return max(fitting)


def _rep_spec(shape):
    nd = len(shape)
    return pl.BlockSpec(shape, lambda i, _nd=nd: (0,) * _nd)


def _conv3_flat(hf, w_ref, b, keep_first, keep_last):
    """Conv1d(k=3, padding=1) on a flattened (m = bt*L, C) f32 tile.

    Shifted taps via pltpu.roll along the row axis (XLU); rows that crossed a
    per-sample boundary are zeroed with precomputed keep-masks (padding=1).
    w_ref: bf16 (3, Cin, Cout), w_ref[k] applies to x[l + k - 1]; b: f32 (1, Cout).
    """
    m = hf.shape[0]
    xm1 = pltpu.roll(hf, shift=1, axis=0) * keep_first       # h[l-1], zero at l==0
    xp1 = pltpu.roll(hf, shift=m - 1, axis=0) * keep_last    # h[l+1], zero at l==L-1
    y = (jnp.dot(xm1.astype(jnp.bfloat16), w_ref[0], preferred_element_type=jnp.float32)
         + jnp.dot(hf.astype(jnp.bfloat16), w_ref[1], preferred_element_type=jnp.float32)
         + jnp.dot(xp1.astype(jnp.bfloat16), w_ref[2], preferred_element_type=jnp.float32))
    return y + b


def _gn_silu(h, gamma, beta, gavg, bt, L):
    """GroupNorm(8) + SiLU on a flattened (m, C) f32 tile.

    Per-sample sums are sublane reductions on the (bt, L, C) view; `gavg` is the
    precomputed same-group averaging matrix, so one small matmul per statistic maps
    column sums to per-channel group mean / variance.  Two-pass variance (torch-like).
    """
    c = h.shape[1]
    h3 = h.reshape(bt, L, c)                                            # free when L % 8 == 0
    col_sum = jnp.sum(h3, axis=1)                                       # (bt, C)  sublane reduce
    mean_c = jnp.dot(col_sum, gavg, preferred_element_type=jnp.float32) # (bt, C)  group mean
    hc3 = h3 - mean_c[:, None, :]
    col_sq = jnp.sum(hc3 * hc3, axis=1)                                 # (bt, C)
    var_c = jnp.dot(col_sq, gavg, preferred_element_type=jnp.float32)   # (bt, C)  group var
    scale = lax.rsqrt(var_c + EPS) * gamma                              # (bt, C)  EUP rsqrt
    y3 = hc3 * scale[:, None, :] + beta
    y3 = y3 * jax.nn.sigmoid(y3)                                        # SiLU
    return y3.reshape(bt * L, c)


def bottleneck1d_kernel(x_ref, tb_ref,
                        w1_ref, b1_ref, g1_ref, be1_ref,
                        w2_ref, b2_ref, g2_ref, be2_ref,
                        gavg_ref, keep_first_ref, keep_last_ref,
                        out_ref):
    bt, L, k1p = x_ref.shape
    c = out_ref.shape[2]
    m = bt * L

    # flatten the batch block for MXU rows (layout-free for L % 8 == 0; demo L=16)
    xf = x_ref[...].reshape(m, k1p)                                     # bf16 im2col'd input

    # conv1: single im2col matmul (bf16 operands, f32 accumulation) + bias
    h = jnp.dot(xf, w1_ref[...], preferred_element_type=jnp.float32) + b1_ref[...]

    gavg = gavg_ref[...]
    h = _gn_silu(h, g1_ref[...], be1_ref[...], gavg, bt, L)

    # conv2: k=3 taps via sublane rolls + boundary keep-masks
    h = _conv3_flat(h, w2_ref, b2_ref[...], keep_first_ref[...], keep_last_ref[...])

    h = _gn_silu(h, g2_ref[...], be2_ref[...], gavg, bt, L)

    # time-embedding bias (hoisted to the wrapper): per-sample broadcast add, no matmul
    out_ref[...] = h.reshape(bt, L, c) + tb_ref[...]


def bottleneck1d(x_ncl, t_emb, params, *, block_batch=None):
    """x_ncl: (B, Cin, L) f32; t_emb: (B, E) f32. Returns (B, Cout, L) f32."""
    B, Cin, L = x_ncl.shape
    Cout = params["w1"].shape[2]
    assert Cout % NUM_GROUPS == 0, "GroupNorm(8) requires out_channels % 8 == 0"
    cs = Cout // NUM_GROUPS
    k1 = 3 * Cin
    k1p = _round_up(k1, LANE)              # im2col'ed conv1 contraction dim, lane-padded
    cout_p = _round_up(Cout, LANE)

    num_cores, vmem_bytes = _chip_info()
    # rough per-row VMEM cost: double-buffered bf16 x + f32 out tiles + f32 temporaries
    bytes_per_row = 4 * k1p + 32 * cout_p
    bt = block_batch if block_batch is not None else _choose_block_batch(
        B, L, bytes_per_row, num_cores, vmem_bytes)
    assert B % bt == 0
    m = bt * L

    # --- layout prep (XLA side): NCL -> NLC, im2col for conv1, channel pad, bf16 cast
    x = jnp.transpose(x_ncl, (0, 2, 1))                               # (B, L, Cin)
    xp = jnp.pad(x, ((0, 0), (1, 1), (0, 0)))
    x_i2c = jnp.concatenate([xp[:, :-2], xp[:, 1:-1], xp[:, 2:]], axis=-1)   # (B, L, 3*Cin)
    x_i2c = jnp.pad(x_i2c, ((0, 0), (0, 0), (0, k1p - k1))).astype(jnp.bfloat16)

    # hoisted time-MLP: one batched matmul outside the kernel
    t_bias = t_emb @ params["wt"] + params["bt"]                      # (B, Cout)
    t_bias = jnp.pad(t_bias, ((0, 0), (0, cout_p - Cout)))[:, None, :]  # (B, 1, Cp)

    # folded conv1 weight (rows ordered tap-major to match the im2col concat); bf16
    w1 = params["w1"].reshape(k1, Cout)
    w1 = jnp.pad(w1, ((0, k1p - k1), (0, cout_p - Cout))).astype(jnp.bfloat16)
    w2 = jnp.pad(params["w2"],
                 ((0, 0), (0, cout_p - Cout), (0, cout_p - Cout))).astype(jnp.bfloat16)

    # Padded-channel invariance: pad channels must stay EXACTLY 0 through both blocks.
    # That relies on bias/gamma/beta being ZERO-padded (pad channels get 0*rsqrt+0)
    # and GAVG having zero rows/cols for pad channels.  Do not pad gamma with ones.
    pad_c = lambda v: jnp.pad(v, ((0, 0), (0, cout_p - Cout)))
    b1, g1, be1 = pad_c(params["b1"]), pad_c(params["g1"]), pad_c(params["be1"])
    b2, g2, be2 = pad_c(params["b2"]), pad_c(params["g2"]), pad_c(params["be2"])

    # GAVG[c, c'] = 1/(L*cs) iff real channels c, c' are in the same group, else 0.
    grp = np.arange(Cout) // cs
    gavg_np = np.zeros((cout_p, cout_p), np.float32)
    gavg_np[:Cout, :Cout] = (grp[:, None] == grp[None, :]).astype(np.float32) / float(L * cs)
    gavg = jnp.asarray(gavg_np)

    # conv2 boundary keep-masks on the flattened (m = bt*L) row axis
    keep_first_np = np.ones((m, 1), np.float32); keep_first_np[0::L] = 0.0
    keep_last_np = np.ones((m, 1), np.float32);  keep_last_np[L - 1::L] = 0.0
    keep_first, keep_last = jnp.asarray(keep_first_np), jnp.asarray(keep_last_np)

    flops = 2 * B * L * (k1p * cout_p + 3 * cout_p * cout_p) + 4 * B * cout_p * cout_p
    bytes_accessed = (x_i2c.size * 2 + B * L * cout_p * 4
                      + w1.size * 2 + w2.size * 2 + gavg.size * 4 + B * cout_p * 4)
    cost = pl.CostEstimate(flops=int(flops),
                           transcendentals=int(2 * B * L * cout_p + 2 * B * cout_p),
                           bytes_accessed=int(bytes_accessed))

    out = pl.pallas_call(
        bottleneck1d_kernel,
        out_shape=jax.ShapeDtypeStruct((B, L, cout_p), jnp.float32),
        grid=(B // bt,),
        in_specs=[
            pl.BlockSpec((bt, L, k1p), lambda i: (i, 0, 0)),          # x (im2col, bf16)
            pl.BlockSpec((bt, 1, cout_p), lambda i: (i, 0, 0)),       # time bias
            _rep_spec((k1p, cout_p)),                                 # w1 folded (bf16)
            _rep_spec((1, cout_p)),                                   # b1
            _rep_spec((1, cout_p)),                                   # gamma1
            _rep_spec((1, cout_p)),                                   # beta1
            _rep_spec((3, cout_p, cout_p)),                           # w2 (bf16)
            _rep_spec((1, cout_p)),                                   # b2
            _rep_spec((1, cout_p)),                                   # gamma2
            _rep_spec((1, cout_p)),                                   # beta2
            _rep_spec((cout_p, cout_p)),                              # GAVG
            _rep_spec((m, 1)),                                        # conv2 left keep-mask
            _rep_spec((m, 1)),                                        # conv2 right keep-mask
        ],
        out_specs=pl.BlockSpec((bt, L, cout_p), lambda i: (i, 0, 0)),
        compiler_params=pltpu.CompilerParams(
            dimension_semantics=("parallel",),
            vmem_limit_bytes=int(min(vmem_bytes // 2, 96 * 1024 * 1024))),
        cost_estimate=cost,
    )(x_i2c, t_bias, w1, b1, g1, be1, w2, b2, g2, be2, gavg, keep_first, keep_last)

    return jnp.transpose(out[:, :, :Cout], (0, 2, 1))                 # back to NCL


def ref_forward(x_ncl, t_emb, params):
    """Pure-JAX f32 reference with identical semantics (NCL in / NCL out)."""
    x = jnp.transpose(x_ncl, (0, 2, 1))                               # (B, L, Cin)

    def conv3(x, w, b):
        xp = jnp.pad(x, ((0, 0), (1, 1), (0, 0)))
        y = (jnp.einsum("blc,co->blo", xp[:, :-2], w[0])
             + jnp.einsum("blc,co->blo", xp[:, 1:-1], w[1])
             + jnp.einsum("blc,co->blo", xp[:, 2:], w[2]))
        return y + b

    def gn(h, gamma, beta):
        B, L, C = h.shape
        cs = C // NUM_GROUPS
        hg = h.reshape(B, L, NUM_GROUPS, cs)
        mean = hg.mean(axis=(1, 3), keepdims=True)
        var = ((hg - mean) ** 2).mean(axis=(1, 3), keepdims=True)
        hn = ((hg - mean) / jnp.sqrt(var + EPS)).reshape(B, L, C)
        return hn * gamma + beta

    h = jax.nn.silu(gn(conv3(x, params["w1"], params["b1"]), params["g1"], params["be1"]))
    h = jax.nn.silu(gn(conv3(h, params["w2"], params["b2"]), params["g2"], params["be2"]))
    t_bias = t_emb @ params["wt"] + params["bt"]                      # (B, Cout)
    out = h + t_bias[:, None, :]
    return jnp.transpose(out, (0, 2, 1))


def init_params(key, in_channels, out_channels, emb_size):
    ks = jax.random.split(key, 8)
    p = {
        # conv weights stored as (3, Cin, Cout); equals torch (Cout, Cin, 3) transposed (2,1,0)
        "w1": 0.1 * jax.random.normal(ks[0], (3, in_channels, out_channels), jnp.float32),
        "b1": 0.1 * jax.random.normal(ks[1], (1, out_channels), jnp.float32),
        "g1": 1.0 + 0.1 * jax.random.normal(ks[2], (1, out_channels), jnp.float32),
        "be1": 0.1 * jax.random.normal(ks[3], (1, out_channels), jnp.float32),
        "w2": 0.1 * jax.random.normal(ks[4], (3, out_channels, out_channels), jnp.float32),
        "b2": 0.1 * jax.random.normal(ks[5], (1, out_channels), jnp.float32),
        "g2": 1.0 + 0.1 * jax.random.normal(ks[6], (1, out_channels), jnp.float32),
        "be2": 0.1 * jax.random.normal(ks[7], (1, out_channels), jnp.float32),
    }
    kt1, kt2 = jax.random.split(jax.random.fold_in(key, 99))
    p["wt"] = 0.1 * jax.random.normal(kt1, (emb_size, out_channels), jnp.float32)
    p["bt"] = 0.1 * jax.random.normal(kt2, (1, out_channels), jnp.float32)
    return p


if __name__ == "__main__":
    B, Cin, Cout, L, E = 16, 16, 32, 16, 32   # Cout divisible by 8 (GroupNorm groups)
    key = jax.random.PRNGKey(0)
    kx, kt, kp = jax.random.split(key, 3)

    x = jax.random.normal(kx, (B, Cin, L), jnp.float32)       # PyTorch NCL input
    t_emb = jax.random.normal(kt, (B, E), jnp.float32)
    params = init_params(kp, Cin, Cout, E)

    out = jax.block_until_ready(jax.jit(bottleneck1d)(x, t_emb, params))
    ref = jax.block_until_ready(ref_forward(x, t_emb, params))
    # bf16 conv matmuls (f32 accumulation, f32 GroupNorm stats) vs f32 reference
    np.testing.assert_allclose(np.asarray(out), np.asarray(ref), rtol=2e-2, atol=2e-2)

    print("KERNEL_OK")
</pallas_src>

<mosaic_0001>
module attributes {stable_mosaic.version = 11 : i64} {
  func.func @bottleneck1d_kernel(%arg0: i32, %arg1: memref<4x16x128xbf16, #tpu.memory_space<vmem>>, %arg2: memref<4x1x128xf32, #tpu.memory_space<vmem>>, %arg3: memref<128x128xbf16, #tpu.memory_space<vmem>>, %arg4: memref<1x128xf32, #tpu.memory_space<vmem>>, %arg5: memref<1x128xf32, #tpu.memory_space<vmem>>, %arg6: memref<1x128xf32, #tpu.memory_space<vmem>>, %arg7: memref<3x128x128xbf16, #tpu.memory_space<vmem>>, %arg8: memref<1x128xf32, #tpu.memory_space<vmem>>, %arg9: memref<1x128xf32, #tpu.memory_space<vmem>>, %arg10: memref<1x128xf32, #tpu.memory_space<vmem>>, %arg11: memref<128x128xf32, #tpu.memory_space<vmem>>, %arg12: memref<64x1xf32, #tpu.memory_space<vmem>>, %arg13: memref<64x1xf32, #tpu.memory_space<vmem>>, %arg14: memref<4x16x128xf32, #tpu.memory_space<vmem>>) attributes {dimension_semantics = [#tpu.dimension_semantics<parallel>], iteration_bounds = array<i64: 4>, scalar_prefetch = 0 : i64, scratch_operands = 0 : i64, tpu.core_type = #tpu.core_type<tc>, window_params = [{transform_indices = @transform_0, window_bounds = array<i64: 4, 16, 128>}, {transform_indices = @transform_1, window_bounds = array<i64: 4, 1, 128>}, {pipeline_mode = #tpu.pipeline_mode<synchronous>, transform_indices = @transform_2, window_bounds = array<i64: 128, 128>}, {pipeline_mode = #tpu.pipeline_mode<synchronous>, transform_indices = @transform_3, window_bounds = array<i64: 1, 128>}, {pipeline_mode = #tpu.pipeline_mode<synchronous>, transform_indices = @transform_4, window_bounds = array<i64: 1, 128>}, {pipeline_mode = #tpu.pipeline_mode<synchronous>, transform_indices = @transform_5, window_bounds = array<i64: 1, 128>}, {pipeline_mode = #tpu.pipeline_mode<synchronous>, transform_indices = @transform_6, window_bounds = array<i64: 3, 128, 128>}, {pipeline_mode = #tpu.pipeline_mode<synchronous>, transform_indices = @transform_7, window_bounds = array<i64: 1, 128>}, {pipeline_mode = #tpu.pipeline_mode<synchronous>, transform_indices = @transform_8, window_bounds = array<i64: 1, 128>}, {pipeline_mode = #tpu.pipeline_mode<synchronous>, transform_indices = @transform_9, window_bounds = array<i64: 1, 128>}, {pipeline_mode = #tpu.pipeline_mode<synchronous>, transform_indices = @transform_10, window_bounds = array<i64: 128, 128>}, {pipeline_mode = #tpu.pipeline_mode<synchronous>, transform_indices = @transform_11, window_bounds = array<i64: 64, 1>}, {pipeline_mode = #tpu.pipeline_mode<synchronous>, transform_indices = @transform_12, window_bounds = array<i64: 64, 1>}, {transform_indices = @transform_13, window_bounds = array<i64: 4, 16, 128>}]} {
    %c0 = arith.constant 0 : index
    %c0_0 = arith.constant 0 : index
    %c0_1 = arith.constant 0 : index
    %0 = vector.load %arg1[%c0, %c0_0, %c0_1] : memref<4x16x128xbf16, #tpu.memory_space<vmem>>, vector<4x16x128xbf16>
    %1 = vector.shape_cast %0 : vector<4x16x128xbf16> to vector<64x128xbf16>
    %c0_2 = arith.constant 0 : index
    %c0_3 = arith.constant 0 : index
    %2 = vector.load %arg3[%c0_2, %c0_3] : memref<128x128xbf16, #tpu.memory_space<vmem>>, vector<128x128xbf16>
    %cst = arith.constant dense<0.000000e+00> : vector<64x128xf32>
    %3 = tpu.matmul %1, %2, %cst {dimension_numbers = #tpu.dot_dimension_numbers<[1], [0], [0], [1], [0, 0, 1, 1], [], []>} : vector<64x128xbf16>, vector<128x128xbf16>, vector<64x128xf32> -> vector<64x128xf32>
    %c0_4 = arith.constant 0 : index
    %c0_5 = arith.constant 0 : index
    %4 = vector.load %arg4[%c0_4, %c0_5] : memref<1x128xf32, #tpu.memory_space<vmem>>, vector<1x128xf32>
    %5 = vector.broadcast %4 : vector<1x128xf32> to vector<64x128xf32>
    %6 = arith.addf %3, %5 : vector<64x128xf32>
    %c0_6 = arith.constant 0 : index
    %c0_7 = arith.constant 0 : index
    %7 = vector.load %arg11[%c0_6, %c0_7] : memref<128x128xf32, #tpu.memory_space<vmem>>, vector<128x128xf32>
    %c0_8 = arith.constant 0 : index
    %c0_9 = arith.constant 0 : index
    %8 = vector.load %arg5[%c0_8, %c0_9] : memref<1x128xf32, #tpu.memory_space<vmem>>, vector<1x128xf32>
    %c0_10 = arith.constant 0 : index
    %c0_11 = arith.constant 0 : index
    %9 = vector.load %arg6[%c0_10, %c0_11] : memref<1x128xf32, #tpu.memory_space<vmem>>, vector<1x128xf32>
    %10 = vector.shape_cast %6 : vector<64x128xf32> to vector<4x16x128xf32>
    %cst_12 = arith.constant dense<0.000000e+00> : vector<4x128xf32>
    %11 = vector.multi_reduction <add>, %10, %cst_12 [1] : vector<4x16x128xf32> to vector<4x128xf32>
    %cst_13 = arith.constant dense<0.000000e+00> : vector<4x128xf32>
    %12 = tpu.matmul %11, %7, %cst_13 {dimension_numbers = #tpu.dot_dimension_numbers<[1], [0], [0], [1], [0, 0, 1, 1], [], []>} : vector<4x128xf32>, vector<128x128xf32>, vector<4x128xf32> -> vector<4x128xf32>
    %13 = vector.shape_cast %12 : vector<4x128xf32> to vector<4x1x128xf32>
    %14 = vector.broadcast %13 : vector<4x1x128xf32> to vector<4x16x128xf32>
    %15 = arith.subf %10, %14 : vector<4x16x128xf32>
    %16 = arith.mulf %15, %15 : vector<4x16x128xf32>
    %cst_14 = arith.constant dense<0.000000e+00> : vector<4x128xf32>
    %17 = vector.multi_reduction <add>, %16, %cst_14 [1] : vector<4x16x128xf32> to vector<4x128xf32>
    %cst_15 = arith.constant dense<0.000000e+00> : vector<4x128xf32>
    %18 = tpu.matmul %17, %7, %cst_15 {dimension_numbers = #tpu.dot_dimension_numbers<[1], [0], [0], [1], [0, 0, 1, 1], [], []>} : vector<4x128xf32>, vector<128x128xf32>, vector<4x128xf32> -> vector<4x128xf32>
    %cst_16 = arith.constant 9.99999974E-6 : f32
    %19 = vector.broadcast %cst_16 : f32 to vector<4x128xf32>
    %20 = arith.addf %18, %19 : vector<4x128xf32>
    %21 = math.rsqrt %20 : vector<4x128xf32>
    %22 = vector.broadcast %8 : vector<1x128xf32> to vector<4x128xf32>
    %23 = arith.mulf %21, %22 : vector<4x128xf32>
    %24 = vector.shape_cast %23 : vector<4x128xf32> to vector<4x1x128xf32>
    %25 = vector.broadcast %24 : vector<4x1x128xf32> to vector<4x16x128xf32>
    %26 = arith.mulf %15, %25 : vector<4x16x128xf32>
    %27 = vector.shape_cast %9 : vector<1x128xf32> to vector<1x1x128xf32>
    %28 = vector.broadcast %27 : vector<1x1x128xf32> to vector<4x16x128xf32>
    %29 = arith.addf %26, %28 : vector<4x16x128xf32>
    %30 = arith.negf %29 : vector<4x16x128xf32>
    %31 = math.exp %30 : vector<4x16x128xf32>
    %cst_17 = arith.constant 1.000000e+00 : f32
    %32 = vector.broadcast %cst_17 : f32 to vector<4x16x128xf32>
    %33 = arith.addf %32, %31 : vector<4x16x128xf32>
    %34 = arith.divf %32, %33 : vector<4x16x128xf32>
    %35 = arith.mulf %29, %34 : vector<4x16x128xf32>
    %36 = vector.shape_cast %35 : vector<4x16x128xf32> to vector<64x128xf32>
    %c0_18 = arith.constant 0 : index
    %c0_19 = arith.constant 0 : index
    %37 = vector.load %arg8[%c0_18, %c0_19] : memref<1x128xf32, #tpu.memory_space<vmem>>, vector<1x128xf32>
    %c0_20 = arith.constant 0 : index
    %c0_21 = arith.constant 0 : index
    %38 = vector.load %arg12[%c0_20, %c0_21] : memref<64x1xf32, #tpu.memory_space<vmem>>, vector<64x1xf32>
    %c0_22 = arith.constant 0 : index
    %c0_23 = arith.constant 0 : index
    %39 = vector.load %arg13[%c0_22, %c0_23] : memref<64x1xf32, #tpu.memory_space<vmem>>, vector<64x1xf32>
    %c1_i32 = arith.constant 1 : i32
    %40 = tpu.dynamic_rotate %36 by %c1_i32 dim 0 : vector<64x128xf32>, i32 -> vector<64x128xf32>
    %41 = vector.broadcast %38 : vector<64x1xf32> to vector<64x128xf32>
    %42 = arith.mulf %40, %41 : vector<64x128xf32>
    %c63_i32 = arith.constant 63 : i32
    %43 = tpu.dynamic_rotate %36 by %c63_i32 dim 0 : vector<64x128xf32>, i32 -> vector<64x128xf32>
    %44 = vector.broadcast %39 : vector<64x1xf32> to vector<64x128xf32>
    %45 = arith.mulf %43, %44 : vector<64x128xf32>
    %46 = arith.truncf %42 : vector<64x128xf32> to vector<64x128xbf16>
    %c0_24 = arith.constant 0 : index
    %c0_25 = arith.constant 0 : index
    %c0_26 = arith.constant 0 : index
    %47 = vector.load %arg7[%c0_24, %c0_25, %c0_26] : memref<3x128x128xbf16, #tpu.memory_space<vmem>>, vector<1x128x128xbf16>
    %48 = vector.shape_cast %47 : vector<1x128x128xbf16> to vector<128x128xbf16>
    %cst_27 = arith.constant dense<0.000000e+00> : vector<64x128xf32>
    %49 = tpu.matmul %46, %48, %cst_27 {dimension_numbers = #tpu.dot_dimension_numbers<[1], [0], [0], [1], [0, 0, 1, 1], [], []>} : vector<64x128xbf16>, vector<128x128xbf16>, vector<64x128xf32> -> vector<64x128xf32>
    %50 = arith.truncf %36 : vector<64x128xf32> to vector<64x128xbf16>
    %c1 = arith.constant 1 : index
    %c0_28 = arith.constant 0 : index
    %c0_29 = arith.constant 0 : index
    %51 = vector.load %arg7[%c1, %c0_28, %c0_29] : memref<3x128x128xbf16, #tpu.memory_space<vmem>>, vector<1x128x128xbf16>
    %52 = vector.shape_cast %51 : vector<1x128x128xbf16> to vector<128x128xbf16>
    %cst_30 = arith.constant dense<0.000000e+00> : vector<64x128xf32>
    %53 = tpu.matmul %50, %52, %cst_30 {dimension_numbers = #tpu.dot_dimension_numbers<[1], [0], [0], [1], [0, 0, 1, 1], [], []>} : vector<64x128xbf16>, vector<128x128xbf16>, vector<64x128xf32> -> vector<64x128xf32>
    %54 = arith.addf %49, %53 : vector<64x128xf32>
    %55 = arith.truncf %45 : vector<64x128xf32> to vector<64x128xbf16>
    %c2 = arith.constant 2 : index
    %c0_31 = arith.constant 0 : index
    %c0_32 = arith.constant 0 : index
    %56 = vector.load %arg7[%c2, %c0_31, %c0_32] : memref<3x128x128xbf16, #tpu.memory_space<vmem>>, vector<1x128x128xbf16>
    %57 = vector.shape_cast %56 : vector<1x128x128xbf16> to vector<128x128xbf16>
    %cst_33 = arith.constant dense<0.000000e+00> : vector<64x128xf32>
    %58 = tpu.matmul %55, %57, %cst_33 {dimension_numbers = #tpu.dot_dimension_numbers<[1], [0], [0], [1], [0, 0, 1, 1], [], []>} : vector<64x128xbf16>, vector<128x128xbf16>, vector<64x128xf32> -> vector<64x128xf32>
    %59 = arith.addf %54, %58 : vector<64x128xf32>
    %60 = vector.broadcast %37 : vector<1x128xf32> to vector<64x128xf32>
    %61 = arith.addf %59, %60 : vector<64x128xf32>
    %c0_34 = arith.constant 0 : index
    %c0_35 = arith.constant 0 : index
    %62 = vector.load %arg9[%c0_34, %c0_35] : memref<1x128xf32, #tpu.memory_space<vmem>>, vector<1x128xf32>
    %c0_36 = arith.constant 0 : index
    %c0_37 = arith.constant 0 : index
    %63 = vector.load %arg10[%c0_36, %c0_37] : memref<1x128xf32, #tpu.memory_space<vmem>>, vector<1x128xf32>
    %64 = vector.shape_cast %61 : vector<64x128xf32> to vector<4x16x128xf32>
    %cst_38 = arith.constant dense<0.000000e+00> : vector<4x128xf32>
    %65 = vector.multi_reduction <add>, %64, %cst_38 [1] : vector<4x16x128xf32> to vector<4x128xf32>
    %cst_39 = arith.constant dense<0.000000e+00> : vector<4x128xf32>
    %66 = tpu.matmul %65, %7, %cst_39 {dimension_numbers = #tpu.dot_dimension_numbers<[1], [0], [0], [1], [0, 0, 1, 1], [], []>} : vector<4x128xf32>, vector<128x128xf32>, vector<4x128xf32> -> vector<4x128xf32>
    %67 = vector.shape_cast %66 : vector<4x128xf32> to vector<4x1x128xf32>
    %68 = vector.broadcast %67 : vector<4x1x128xf32> to vector<4x16x128xf32>
    %69 = arith.subf %64, %68 : vector<4x16x128xf32>
    %70 = arith.mulf %69, %69 : vector<4x16x128xf32>
    %cst_40 = arith.constant dense<0.000000e+00> : vector<4x128xf32>
    %71 = vector.multi_reduction <add>, %70, %cst_40 [1] : vector<4x16x128xf32> to vector<4x128xf32>
    %cst_41 = arith.constant dense<0.000000e+00> : vector<4x128xf32>
    %72 = tpu.matmul %71, %7, %cst_41 {dimension_numbers = #tpu.dot_dimension_numbers<[1], [0], [0], [1], [0, 0, 1, 1], [], []>} : vector<4x128xf32>, vector<128x128xf32>, vector<4x128xf32> -> vector<4x128xf32>
    %cst_42 = arith.constant 9.99999974E-6 : f32
    %73 = vector.broadcast %cst_42 : f32 to vector<4x128xf32>
    %74 = arith.addf %72, %73 : vector<4x128xf32>
    %75 = math.rsqrt %74 : vector<4x128xf32>
    %76 = vector.broadcast %62 : vector<1x128xf32> to vector<4x128xf32>
    %77 = arith.mulf %75, %76 : vector<4x128xf32>
    %78 = vector.shape_cast %77 : vector<4x128xf32> to vector<4x1x128xf32>
    %79 = vector.broadcast %78 : vector<4x1x128xf32> to vector<4x16x128xf32>
    %80 = arith.mulf %69, %79 : vector<4x16x128xf32>
    %81 = vector.shape_cast %63 : vector<1x128xf32> to vector<1x1x128xf32>
    %82 = vector.broadcast %81 : vector<1x1x128xf32> to vector<4x16x128xf32>
    %83 = arith.addf %80, %82 : vector<4x16x128xf32>
    %84 = arith.negf %83 : vector<4x16x128xf32>
    %85 = math.exp %84 : vector<4x16x128xf32>
    %cst_43 = arith.constant 1.000000e+00 : f32
    %86 = vector.broadcast %cst_43 : f32 to vector<4x16x128xf32>
    %87 = arith.addf %86, %85 : vector<4x16x128xf32>
    %88 = arith.divf %86, %87 : vector<4x16x128xf32>
    %89 = arith.mulf %83, %88 : vector<4x16x128xf32>
    %90 = vector.shape_cast %89 : vector<4x16x128xf32> to vector<64x128xf32>
    %91 = vector.shape_cast %90 : vector<64x128xf32> to vector<4x16x128xf32>
    %c0_44 = arith.constant 0 : index
    %c0_45 = arith.constant 0 : index
    %c0_46 = arith.constant 0 : index
    %92 = vector.load %arg2[%c0_44, %c0_45, %c0_46] : memref<4x1x128xf32, #tpu.memory_space<vmem>>, vector<4x1x128xf32>
    %93 = vector.broadcast %92 : vector<4x1x128xf32> to vector<4x16x128xf32>
    %94 = arith.addf %91, %93 : vector<4x16x128xf32>
    %c0_47 = arith.constant 0 : index
    %c0_48 = arith.constant 0 : index
    %c0_49 = arith.constant 0 : index
    %95 = vector.load %arg14[%c0_47, %c0_48, %c0_49] : memref<4x16x128xf32, #tpu.memory_space<vmem>>, vector<4x16x128xf32>
    tpu.vector_store %arg14[%c0_47, %c0_48, %c0_49], %94 {strides = array<i32>} : memref<4x16x128xf32, #tpu.memory_space<vmem>>, vector<4x16x128xf32>,
    return
  }
  func.func @transform_0(%arg0: i32) -> (i32, i32, i32) {
    %c0_i32 = arith.constant 0 : i32
    %c0_i32_0 = arith.constant 0 : i32
    %c0_i32_1 = arith.constant 0 : i32
    return %arg0, %c0_i32, %c0_i32_0 : i32, i32, i32
  }
  func.func @transform_1(%arg0: i32) -> (i32, i32, i32) {
    %c0_i32 = arith.constant 0 : i32
    %c0_i32_0 = arith.constant 0 : i32
    %c0_i32_1 = arith.constant 0 : i32
    return %arg0, %c0_i32, %c0_i32_0 : i32, i32, i32
  }
  func.func @transform_2(%arg0: i32) -> (i32, i32) {
    %c0_i32 = arith.constant 0 : i32
    %c0_i32_0 = arith.constant 0 : i32
    %c0_i32_1 = arith.constant 0 : i32
    return %c0_i32, %c0_i32_0 : i32, i32
  }
  func.func @transform_3(%arg0: i32) -> (i32, i32) {
    %c0_i32 = arith.constant 0 : i32
    %c0_i32_0 = arith.constant 0 : i32
    %c0_i32_1 = arith.constant 0 : i32
    return %c0_i32, %c0_i32_0 : i32, i32
  }
  func.func @transform_4(%arg0: i32) -> (i32, i32) {
    %c0_i32 = arith.constant 0 : i32
    %c0_i32_0 = arith.constant 0 : i32
    %c0_i32_1 = arith.constant 0 : i32
    return %c0_i32, %c0_i32_0 : i32, i32
  }
  func.func @transform_5(%arg0: i32) -> (i32, i32) {
    %c0_i32 = arith.constant 0 : i32
    %c0_i32_0 = arith.constant 0 : i32
    %c0_i32_1 = arith.constant 0 : i32
    return %c0_i32, %c0_i32_0 : i32, i32
  }
  func.func @transform_6(%arg0: i32) -> (i32, i32, i32) {
    %c0_i32 = arith.constant 0 : i32
    %c0_i32_0 = arith.constant 0 : i32
    %c0_i32_1 = arith.constant 0 : i32
    %c0_i32_2 = arith.constant 0 : i32
    return %c0_i32, %c0_i32_0, %c0_i32_1 : i32, i32, i32
  }
  func.func @transform_7(%arg0: i32) -> (i32, i32) {
    %c0_i32 = arith.constant 0 : i32
    %c0_i32_0 = arith.constant 0 : i32
    %c0_i32_1 = arith.constant 0 : i32
    return %c0_i32, %c0_i32_0 : i32, i32
  }
  func.func @transform_8(%arg0: i32) -> (i32, i32) {
    %c0_i32 = arith.constant 0 : i32
    %c0_i32_0 = arith.constant 0 : i32
    %c0_i32_1 = arith.constant 0 : i32
    return %c0_i32, %c0_i32_0 : i32, i32
  }
  func.func @transform_9(%arg0: i32) -> (i32, i32) {
    %c0_i32 = arith.constant 0 : i32
    %c0_i32_0 = arith.constant 0 : i32
    %c0_i32_1 = arith.constant 0 : i32
    return %c0_i32, %c0_i32_0 : i32, i32
  }
  func.func @transform_10(%arg0: i32) -> (i32, i32) {
    %c0_i32 = arith.constant 0 : i32
    %c0_i32_0 = arith.constant 0 : i32
    %c0_i32_1 = arith.constant 0 : i32
    return %c0_i32, %c0_i32_0 : i32, i32
  }
  func.func @transform_11(%arg0: i32) -> (i32, i32) {
    %c0_i32 = arith.constant 0 : i32
    %c0_i32_0 = arith.constant 0 : i32
    %c0_i32_1 = arith.constant 0 : i32
    return %c0_i32, %c0_i32_0 : i32, i32
  }
  func.func @transform_12(%arg0: i32) -> (i32, i32) {
    %c0_i32 = arith.constant 0 : i32
    %c0_i32_0 = arith.constant 0 : i32
    %c0_i32_1 = arith.constant 0 : i32
    return %c0_i32, %c0_i32_0 : i32, i32
  }
  func.func @transform_13(%arg0: i32) -> (i32, i32, i32) {
    %c0_i32 = arith.constant 0 : i32
    %c0_i32_0 = arith.constant 0 : i32
    %c0_i32_1 = arith.constant 0 : i32
    return %arg0, %c0_i32, %c0_i32_0 : i32, i32, i32
  }
}

</mosaic_0001>

<llo_original>
// kernel: bottleneck1d.1
$region0: #{bottleneck1d.1}
  #allocation0 [shape = 'u32[]', space=smem, size = 0x4, offset = 0x4, fixed_abs, tag = 'smem constant byte address 0x4 - core index']
  #allocation1 [shape = 'u32[144,128]{1,0:T(1,128)}', space=vmem, size = 0x12000, scoped, tag = 'internal scratch']
  %s0 = inlined_call_operand.vmem [shape: bf16[16,16,128], index: 0, kind: input, shape index: {}]
  %s1 = inlined_call_operand.vmem [shape: f32[16,1,128], index: 1, kind: input, shape index: {}]
  %s2 = inlined_call_operand.vmem [shape: bf16[128,128], index: 2, kind: input, shape index: {}]
  %s3 = inlined_call_operand.vmem [shape: f32[1,128], index: 3, kind: input, shape index: {}]
  %s4 = inlined_call_operand.vmem [shape: f32[1,128], index: 4, kind: input, shape index: {}]
  %s5 = inlined_call_operand.vmem [shape: f32[1,128], index: 5, kind: input, shape index: {}]
  %s6 = inlined_call_operand.vmem [shape: bf16[3,128,128], index: 6, kind: input, shape index: {}]
  %s7 = inlined_call_operand.vmem [shape: f32[1,128], index: 7, kind: input, shape index: {}]
  %s8 = inlined_call_operand.vmem [shape: f32[1,128], index: 8, kind: input, shape index: {}]
  %s9 = inlined_call_operand.vmem [shape: f32[1,128], index: 9, kind: input, shape index: {}]
  %s10 = inlined_call_operand.vmem [shape: f32[128,128], index: 10, kind: input, shape index: {}]
  %s11 = inlined_call_operand.vmem [shape: f32[64,1], index: 11, kind: input, shape index: {}]
  %s12 = inlined_call_operand.vmem [shape: f32[64,1], index: 12, kind: input, shape index: {}]
  %s13 = inlined_call_operand.vmem [shape: f32[16,16,128], index: 13, kind: output, shape index: {}]
  %s14 = sld [smem:[#allocation0]]
  $region85: #{bottleneck1d.1} parent=0
    _
  %s16 = ssub.s32 1, %s14
  %s17 = scalar_select 0, %s16, %s14
  loop: start=0, step=1, limit=6
  $region2: #{bottleneck1d.1} parent=0 // loop_pre_header
    _
  $region3: #{bottleneck1d.1} parent=0 // loop_header
    %s19 = sphi 0, %s23
    %p20 = scmp.ge.s32.totalorder %s19, 6
    %s29 = sphi 0, %s31
    %s32 = sphi 0, %s29
    %s33 = sphi 0, %s32
    %s49 = sphi 0, %s33
    %s55 = sphi 0, %s57
    %s58 = sphi 0, %s55
    %s59 = sphi 0, %s58
    %s75 = sphi 0, %s59
    %s79 = sphi 0, %s79
    %s81 = sphi 0, %s79
    %s82 = sphi 0, %s81
    %s96 = sphi 0, %s82
    %s100 = sphi 0, %s100
    %s102 = sphi 0, %s100
    %s103 = sphi 0, %s102
    %s117 = sphi 0, %s103
    %s121 = sphi 0, %s121
    %s123 = sphi 0, %s121
    %s124 = sphi 0, %s123
    %s138 = sphi 0, %s124
    %s142 = sphi 0, %s142
    %s144 = sphi 0, %s142
    %s145 = sphi 0, %s144
    %s159 = sphi 0, %s145
    %s163 = sphi 0, %s163
    %s165 = sphi 0, %s163
    %s166 = sphi 0, %s165
    %s180 = sphi 0, %s166
    %s184 = sphi 0, %s184
    %s186 = sphi 0, %s184
    %s187 = sphi 0, %s186
    %s201 = sphi 0, %s187
    %s205 = sphi 0, %s205
    %s207 = sphi 0, %s205
    %s208 = sphi 0, %s207
    %s222 = sphi 0, %s208
    %s226 = sphi 0, %s226
    %s228 = sphi 0, %s226
    %s229 = sphi 0, %s228
    %s243 = sphi 0, %s229
    %s247 = sphi 0, %s247
    %s249 = sphi 0, %s247
    %s250 = sphi 0, %s249
    %s264 = sphi 0, %s250
    %s268 = sphi 0, %s268
    %s270 = sphi 0, %s268
    %s271 = sphi 0, %s270
    %s285 = sphi 0, %s271
    %s289 = sphi 0, %s289
    %s291 = sphi 0, %s289
    %s292 = sphi 0, %s291
    %s306 = sphi 0, %s292
    %s312 = sphi 0, %s314
    %s315 = sphi 0, %s312
    %s316 = sphi 0, %s315
    %s332 = sphi 0, %s316
  $region4: #{bottleneck1d.1} parent=0 // loop_header_branch
    %22 = sbr.rel (%p20) target = $region8
  $region5: #{bottleneck1d.1} parent=0 // loop_body
    %s24 = ssub.s32 %s19, 1
    %s25 = ssub.s32 %s19, 2
    %s26 = sadd.s32 %s19, 1
    %s27 = ssub.s32 %s19, %s26
    %p28 = scmp.eq.s32.totalorder %s27, 0
    %s30 = sadd.s32 %s29, 1
    %s31 = scalar_select %p28, %s29, %s30
    %p34 = pneg %p28
    %p35 = scmp.eq.s32.totalorder %s19, 3
    %p36 = por %p34, %p35
    %p37 = scmp.ne.s32.totalorder %s29, %s32
    %p38 = scmp.eq.s32.totalorder %s19, 0
    %p39 = por %p37, %p38
    %p40 = scmp.ne.s32.totalorder %s29, %s32
    %p41 = scmp.eq.s32.totalorder %s24, 3
    %p42 = por %p40, %p41
    %p43 = scmp.ne.s32.totalorder %s32, %s33
    %p44 = scmp.eq.s32.totalorder %s24, 0
    %p45 = por %p43, %p44
    %p46 = scmp.ne.s32.totalorder %s32, %s33
    %p47 = scmp.eq.s32.totalorder %s25, 3
    %p48 = por %p46, %p47
    %p50 = scmp.ne.s32.totalorder %s33, %s49
    %p51 = scmp.eq.s32.totalorder %s25, 0
    %p52 = por %p50, %p51
    %s53 = ssub.s32 %s19, %s26
    %p54 = scmp.eq.s32.totalorder %s53, 0
    %s56 = sadd.s32 %s55, 1
    %s57 = scalar_select %p54, %s55, %s56
    %p60 = pneg %p54
    %p61 = scmp.eq.s32.totalorder %s19, 3
    %p62 = por %p60, %p61
    %p63 = scmp.ne.s32.totalorder %s55, %s58
    %p64 = scmp.eq.s32.totalorder %s19, 0
    %p65 = por %p63, %p64
    %p66 = scmp.ne.s32.totalorder %s55, %s58
    %p67 = scmp.eq.s32.totalorder %s24, 3
    %p68 = por %p66, %p67
    %p69 = scmp.ne.s32.totalorder %s58, %s59
    %p70 = scmp.eq.s32.totalorder %s24, 0
    %p71 = por %p69, %p70
    %p72 = scmp.ne.s32.totalorder %s58, %s59
    %p73 = scmp.eq.s32.totalorder %s25, 3
    %p74 = por %p72, %p73
    %p76 = scmp.ne.s32.totalorder %s59, %s75
    %p77 = scmp.eq.s32.totalorder %s25, 0
    %p78 = por %p76, %p77
    %s80 = sadd.s32 %s79, 1
    %p83 = scmp.eq.s32.totalorder %s19, 3
    %p84 = scmp.ne.s32.totalorder %s79, %s81
    %p85 = scmp.eq.s32.totalorder %s19, 0
    %p86 = por %p84, %p85
    %p87 = scmp.ne.s32.totalorder %s79, %s81
    %p88 = scmp.eq.s32.totalorder %s24, 3
    %p89 = por %p87, %p88
    %p90 = scmp.ne.s32.totalorder %s81, %s82
    %p91 = scmp.eq.s32.totalorder %s24, 0
    %p92 = por %p90, %p91
    %p93 = scmp.ne.s32.totalorder %s81, %s82
    %p94 = scmp.eq.s32.totalorder %s25, 3
    %p95 = por %p93, %p94
    %p97 = scmp.ne.s32.totalorder %s82, %s96
    %p98 = scmp.eq.s32.totalorder %s25, 0
    %p99 = por %p97, %p98
    %s101 = sadd.s32 %s100, 1
    %p104 = scmp.eq.s32.totalorder %s19, 3
    %p105 = scmp.ne.s32.totalorder %s100, %s102
    %p106 = scmp.eq.s32.totalorder %s19, 0
    %p107 = por %p105, %p106
    %p108 = scmp.ne.s32.totalorder %s100, %s102
    %p109 = scmp.eq.s32.totalorder %s24, 3
    %p110 = por %p108, %p109
    %p111 = scmp.ne.s32.totalorder %s102, %s103
    %p112 = scmp.eq.s32.totalorder %s24, 0
    %p113 = por %p111, %p112
    %p114 = scmp.ne.s32.totalorder %s102, %s103
    %p115 = scmp.eq.s32.totalorder %s25, 3
    %p116 = por %p114, %p115
    %p118 = scmp.ne.s32.totalorder %s103, %s117
    %p119 = scmp.eq.s32.totalorder %s25, 0
    %p120 = por %p118, %p119
    %s122 = sadd.s32 %s121, 1
    %p125 = scmp.eq.s32.totalorder %s19, 3
    %p126 = scmp.ne.s32.totalorder %s121, %s123
    %p127 = scmp.eq.s32.totalorder %s19, 0
    %p128 = por %p126, %p127
    %p129 = scmp.ne.s32.totalorder %s121, %s123
    %p130 = scmp.eq.s32.totalorder %s24, 3
    %p131 = por %p129, %p130
    %p132 = scmp.ne.s32.totalorder %s123, %s124
    %p133 = scmp.eq.s32.totalorder %s24, 0
    %p134 = por %p132, %p133
    %p135 = scmp.ne.s32.totalorder %s123, %s124
    %p136 = scmp.eq.s32.totalorder %s25, 3
    %p137 = por %p135, %p136
    %p139 = scmp.ne.s32.totalorder %s124, %s138
    %p140 = scmp.eq.s32.totalorder %s25, 0
    %p141 = por %p139, %p140
    %s143 = sadd.s32 %s142, 1
    %p146 = scmp.eq.s32.totalorder %s19, 3
    %p147 = scmp.ne.s32.totalorder %s142, %s144
    %p148 = scmp.eq.s32.totalorder %s19, 0
    %p149 = por %p147, %p148
    %p150 = scmp.ne.s32.totalorder %s142, %s144
    %p151 = scmp.eq.s32.totalorder %s24, 3
    %p152 = por %p150, %p151
    %p153 = scmp.ne.s32.totalorder %s144, %s145
    %p154 = scmp.eq.s32.totalorder %s24, 0
    %p155 = por %p153, %p154
    %p156 = scmp.ne.s32.totalorder %s144, %s145
    %p157 = scmp.eq.s32.totalorder %s25, 3
    %p158 = por %p156, %p157
    %p160 = scmp.ne.s32.totalorder %s145, %s159
    %p161 = scmp.eq.s32.totalorder %s25, 0
    %p162 = por %p160, %p161
    %s164 = sadd.s32 %s163, 1
    %p167 = scmp.eq.s32.totalorder %s19, 3
    %p168 = scmp.ne.s32.totalorder %s163, %s165
    %p169 = scmp.eq.s32.totalorder %s19, 0
    %p170 = por %p168, %p169
    %p171 = scmp.ne.s32.totalorder %s163, %s165
    %p172 = scmp.eq.s32.totalorder %s24, 3
    %p173 = por %p171, %p172
    %p174 = scmp.ne.s32.totalorder %s165, %s166
    %p175 = scmp.eq.s32.totalorder %s24, 0
    %p176 = por %p174, %p175
    %p177 = scmp.ne.s32.totalorder %s165, %s166
    %p178 = scmp.eq.s32.totalorder %s25, 3
    %p179 = por %p177, %p178
    %p181 = scmp.ne.s32.totalorder %s166, %s180
    %p182 = scmp.eq.s32.totalorder %s25, 0
    %p183 = por %p181, %p182
    %s185 = sadd.s32 %s184, 1
    %p188 = scmp.eq.s32.totalorder %s19, 3
    %p189 = scmp.ne.s32.totalorder %s184, %s186
    %p190 = scmp.eq.s32.totalorder %s19, 0
    %p191 = por %p189, %p190
    %p192 = scmp.ne.s32.totalorder %s184, %s186
    %p193 = scmp.eq.s32.totalorder %s24, 3
    %p194 = por %p192, %p193
    %p195 = scmp.ne.s32.totalorder %s186, %s187
    %p196 = scmp.eq.s32.totalorder %s24, 0
    %p197 = por %p195, %p196
    %p198 = scmp.ne.s32.totalorder %s186, %s187
    %p199 = scmp.eq.s32.totalorder %s25, 3
    %p200 = por %p198, %p199
    %p202 = scmp.ne.s32.totalorder %s187, %s201
    %p203 = scmp.eq.s32.totalorder %s25, 0
    %p204 = por %p202, %p203
    %s206 = sadd.s32 %s205, 1
    %p209 = scmp.eq.s32.totalorder %s19, 3
    %p210 = scmp.ne.s32.totalorder %s205, %s207
    %p211 = scmp.eq.s32.totalorder %s19, 0
    %p212 = por %p210, %p211
    %p213 = scmp.ne.s32.totalorder %s205, %s207
    %p214 = scmp.eq.s32.totalorder %s24, 3
    %p215 = por %p213, %p214
    %p216 = scmp.ne.s32.totalorder %s207, %s208
    %p217 = scmp.eq.s32.totalorder %s24, 0
    %p218 = por %p216, %p217
    %p219 = scmp.ne.s32.totalorder %s207, %s208
    %p220 = scmp.eq.s32.totalorder %s25, 3
    %p221 = por %p219, %p220
    %p223 = scmp.ne.s32.totalorder %s208, %s222
    %p224 = scmp.eq.s32.totalorder %s25, 0
    %p225 = por %p223, %p224
    %s227 = sadd.s32 %s226, 1
    %p230 = scmp.eq.s32.totalorder %s19, 3
    %p231 = scmp.ne.s32.totalorder %s226, %s228
    %p232 = scmp.eq.s32.totalorder %s19, 0
    %p233 = por %p231, %p232
    %p234 = scmp.ne.s32.totalorder %s226, %s228
    %p235 = scmp.eq.s32.totalorder %s24, 3
    %p236 = por %p234, %p235
    %p237 = scmp.ne.s32.totalorder %s228, %s229
    %p238 = scmp.eq.s32.totalorder %s24, 0
    %p239 = por %p237, %p238
    %p240 = scmp.ne.s32.totalorder %s228, %s229
    %p241 = scmp.eq.s32.totalorder %s25, 3
    %p242 = por %p240, %p241
    %p244 = scmp.ne.s32.totalorder %s229, %s243
    %p245 = scmp.eq.s32.totalorder %s25, 0
    %p246 = por %p244, %p245
    %s248 = sadd.s32 %s247, 1
    %p251 = scmp.eq.s32.totalorder %s19, 3
    %p252 = scmp.ne.s32.totalorder %s247, %s249
    %p253 = scmp.eq.s32.totalorder %s19, 0
    %p254 = por %p252, %p253
    %p255 = scmp.ne.s32.totalorder %s247, %s249
    %p256 = scmp.eq.s32.totalorder %s24, 3
    %p257 = por %p255, %p256
    %p258 = scmp.ne.s32.totalorder %s249, %s250
    %p259 = scmp.eq.s32.totalorder %s24, 0
    %p260 = por %p258, %p259
    %p261 = scmp.ne.s32.totalorder %s249, %s250
    %p262 = scmp.eq.s32.totalorder %s25, 3
    %p263 = por %p261, %p262
    %p265 = scmp.ne.s32.totalorder %s250, %s264
    %p266 = scmp.eq.s32.totalorder %s25, 0
    %p267 = por %p265, %p266
    %s269 = sadd.s32 %s268, 1
    %p272 = scmp.eq.s32.totalorder %s19, 3
    %p273 = scmp.ne.s32.totalorder %s268, %s270
    %p274 = scmp.eq.s32.totalorder %s19, 0
    %p275 = por %p273, %p274
    %p276 = scmp.ne.s32.totalorder %s268, %s270
    %p277 = scmp.eq.s32.totalorder %s24, 3
    %p278 = por %p276, %p277
    %p279 = scmp.ne.s32.totalorder %s270, %s271
    %p280 = scmp.eq.s32.totalorder %s24, 0
    %p281 = por %p279, %p280
    %p282 = scmp.ne.s32.totalorder %s270, %s271
    %p283 = scmp.eq.s32.totalorder %s25, 3
    %p284 = por %p282, %p283
    %p286 = scmp.ne.s32.totalorder %s271, %s285
    %p287 = scmp.eq.s32.totalorder %s25, 0
    %p288 = por %p286, %p287
    %s290 = sadd.s32 %s289, 1
    %p293 = scmp.eq.s32.totalorder %s19, 3
    %p294 = scmp.ne.s32.totalorder %s289, %s291
    %p295 = scmp.eq.s32.totalorder %s19, 0
    %p296 = por %p294, %p295
    %p297 = scmp.ne.s32.totalorder %s289, %s291
    %p298 = scmp.eq.s32.totalorder %s24, 3
    %p299 = por %p297, %p298
    %p300 = scmp.ne.s32.totalorder %s291, %s292
    %p301 = scmp.eq.s32.totalorder %s24, 0
    %p302 = por %p300, %p301
    %p303 = scmp.ne.s32.totalorder %s291, %s292
    %p304 = scmp.eq.s32.totalorder %s25, 3
    %p305 = por %p303, %p304
    %p307 = scmp.ne.s32.totalorder %s292, %s306
    %p308 = scmp.eq.s32.totalorder %s25, 0
    %p309 = por %p307, %p308
    %s310 = ssub.s32 %s19, %s26
    %p311 = scmp.eq.s32.totalorder %s310, 0
    %s313 = sadd.s32 %s312, 1
    %s314 = scalar_select %p311, %s312, %s313
    %p317 = pneg %p311
    %p318 = scmp.eq.s32.totalorder %s19, 3
    %p319 = por %p317, %p318
    %p320 = scmp.ne.s32.totalorder %s312, %s315
    %p321 = scmp.eq.s32.totalorder %s19, 0
    %p322 = por %p320, %p321
    %p323 = scmp.ne.s32.totalorder %s312, %s315
    %p324 = scmp.eq.s32.totalorder %s24, 3
    %p325 = por %p323, %p324
    %p326 = scmp.ne.s32.totalorder %s315, %s316
    %p327 = scmp.eq.s32.totalorder %s24, 0
    %p328 = por %p326, %p327
    %p329 = scmp.ne.s32.totalorder %s315, %s316
    %p330 = scmp.eq.s32.totalorder %s25, 3
    %p331 = por %p329, %p330
    %p333 = scmp.ne.s32.totalorder %s316, %s332
    %p334 = scmp.eq.s32.totalorder %s25, 0
    %p335 = por %p333, %p334
    %p336 = scmp.le.s32.totalorder 1, %s19
    %p337 = scmp.lt.s32.totalorder %s19, 5
    %p338 = pnand %p336, %p337
    %p339 = pneg %p338
    // Predicated region
    $region9: #{bottleneck1d.1} parent=5 // pred_check
      _
    $region10: #{bottleneck1d.1} parent=5 // pred_check_branch
      %341 = sbr.rel (%p338) target = $region12
    $region11: #{bottleneck1d.1} parent=5 // pred_region
      %s342 = ssub.s32 %s19, 1
      // Predicated region
      $region13: #{bottleneck1d.1} parent=11 // pred_check
        %p343 = pneg %p92
      $region14: #{bottleneck1d.1} parent=11 // pred_check_branch
        %345 = sbr.rel (%p343) target = $region16
      $region15: #{bottleneck1d.1} parent=11 // pred_region
        _
      $region16: #{bottleneck1d.1} parent=11 // pred_fallthru
        _
      // Predicated region
      $region17: #{bottleneck1d.1} parent=11 // pred_check
        %p346 = pneg %p113
      $region18: #{bottleneck1d.1} parent=11 // pred_check_branch
        %348 = sbr.rel (%p346) target = $region20
      $region19: #{bottleneck1d.1} parent=11 // pred_region
        _
      $region20: #{bottleneck1d.1} parent=11 // pred_fallthru
        _
      // Predicated region
      $region21: #{bottleneck1d.1} parent=11 // pred_check
        %p349 = pneg %p134
      $region22: #{bottleneck1d.1} parent=11 // pred_check_branch
        %351 = sbr.rel (%p349) target = $region24
      $region23: #{bottleneck1d.1} parent=11 // pred_region
        _
      $region24: #{bottleneck1d.1} parent=11 // pred_fallthru
        _
      // Predicated region
      $region25: #{bottleneck1d.1} parent=11 // pred_check
        %p352 = pneg %p155
      $region26: #{bottleneck1d.1} parent=11 // pred_check_branch
        %354 = sbr.rel (%p352) target = $region28
      $region27: #{bottleneck1d.1} parent=11 // pred_region
        _
      $region28: #{bottleneck1d.1} parent=11 // pred_fallthru
        _
      // Predicated region
      $region29: #{bottleneck1d.1} parent=11 // pred_check
        %p355 = pneg %p176
      $region30: #{bottleneck1d.1} parent=11 // pred_check_branch
        %357 = sbr.rel (%p355) target = $region32
      $region31: #{bottleneck1d.1} parent=11 // pred_region
        _
      $region32: #{bottleneck1d.1} parent=11 // pred_fallthru
        _
      // Predicated region
      $region33: #{bottleneck1d.1} parent=11 // pred_check
        %p358 = pneg %p197
      $region34: #{bottleneck1d.1} parent=11 // pred_check_branch
        %360 = sbr.rel (%p358) target = $region36
      $region35: #{bottleneck1d.1} parent=11 // pred_region
        _
      $region36: #{bottleneck1d.1} parent=11 // pred_fallthru
        _
      // Predicated region
      $region37: #{bottleneck1d.1} parent=11 // pred_check
        %p361 = pneg %p218
      $region38: #{bottleneck1d.1} parent=11 // pred_check_branch
        %363 = sbr.rel (%p361) target = $region40
      $region39: #{bottleneck1d.1} parent=11 // pred_region
        _
      $region40: #{bottleneck1d.1} parent=11 // pred_fallthru
        _
      // Predicated region
      $region41: #{bottleneck1d.1} parent=11 // pred_check
        %p364 = pneg %p239
      $region42: #{bottleneck1d.1} parent=11 // pred_check_branch
        %366 = sbr.rel (%p364) target = $region44
      $region43: #{bottleneck1d.1} parent=11 // pred_region
        _
      $region44: #{bottleneck1d.1} parent=11 // pred_fallthru
        _
      // Predicated region
      $region45: #{bottleneck1d.1} parent=11 // pred_check
        %p367 = pneg %p260
      $region46: #{bottleneck1d.1} parent=11 // pred_check_branch
        %369 = sbr.rel (%p367) target = $region48
      $region47: #{bottleneck1d.1} parent=11 // pred_region
        _
      $region48: #{bottleneck1d.1} parent=11 // pred_fallthru
        _
      // Predicated region
      $region49: #{bottleneck1d.1} parent=11 // pred_check
        %p370 = pneg %p281
      $region50: #{bottleneck1d.1} parent=11 // pred_check_branch
        %372 = sbr.rel (%p370) target = $region52
      $region51: #{bottleneck1d.1} parent=11 // pred_region
        _
      $region52: #{bottleneck1d.1} parent=11 // pred_fallthru
        _
      // Predicated region
      $region53: #{bottleneck1d.1} parent=11 // pred_check
        %p373 = pneg %p302
      $region54: #{bottleneck1d.1} parent=11 // pred_check_branch
        %375 = sbr.rel (%p373) target = $region56
      $region55: #{bottleneck1d.1} parent=11 // pred_region
        _
      $region56: #{bottleneck1d.1} parent=11 // pred_fallthru
        _
    $region12: #{bottleneck1d.1} parent=5 // pred_fallthru
      _
    %p376 = scmp.lt.s32.totalorder %s19, 4
    // Predicated region
    $region57: #{bottleneck1d.1} parent=5 // pred_check
      %p377 = pneg %p376
    $region58: #{bottleneck1d.1} parent=5 // pred_check_branch
      %379 = sbr.rel (%p377) target = $region60
    $region59: #{bottleneck1d.1} parent=5 // pred_region
      // Predicated region
      $region61: #{bottleneck1d.1} parent=59 // pred_check
        %p380 = pneg %p39
      $region62: #{bottleneck1d.1} parent=59 // pred_check_branch
        %382 = sbr.rel (%p380) target = $region64
      $region63: #{bottleneck1d.1} parent=59 // pred_region
        %s383 = smul.u32 4, %s19
        %p384 = scmp.lt.s32.totalorder %s383, 15
        %s385 = scalar_select %p384, %s383, 15
        %s386 = smul.addr %s385, 2
        %s387 = smul.addr %s386, 4
        %s388 = scalar_lea.vmem %s0, %s387
        %s389 = smul.u32 4, %s19
      $region64: #{bottleneck1d.1} parent=59 // pred_fallthru
        _
      // Predicated region
      $region65: #{bottleneck1d.1} parent=59 // pred_check
        %p390 = pneg %p65
      $region66: #{bottleneck1d.1} parent=59 // pred_check_branch
        %392 = sbr.rel (%p390) target = $region68
      $region67: #{bottleneck1d.1} parent=59 // pred_region
        %s393 = smul.u32 4, %s19
        %p394 = scmp.lt.s32.totalorder %s393, 15
        %s395 = scalar_select %p394, %s393, 15
        %s396 = scalar_lea.vmem %s1, %s395
        %s397 = smul.u32 4, %s19
      $region68: #{bottleneck1d.1} parent=59 // pred_fallthru
        _
    $region60: #{bottleneck1d.1} parent=5 // pred_fallthru
      _
    %p398 = scmp.le.s32.totalorder 1, %s19
    %p399 = scmp.lt.s32.totalorder %s19, 5
    %p400 = pnand %p398, %p399
    %p401 = pneg %p400
    // Predicated region
    $region69: #{bottleneck1d.1} parent=5 // pred_check
      _
    $region70: #{bottleneck1d.1} parent=5 // pred_check_branch
      %403 = sbr.rel (%p400) target = $region72
    $region71: #{bottleneck1d.1} parent=5 // pred_region
      %s404 = ssub.s32 %s19, 1
      %s405 = smul.u32 4, %s24
      %p406 = scmp.lt.s32.totalorder %s405, 15
      %s407 = scalar_select %p406, %s405, 15
      %s408 = smul.addr %s407, 2
      %s409 = smul.addr %s408, 4
      %s410 = scalar_lea.vmem %s0, %s409
      %p411 = pneg %p45
      %p412 = pneg %p42
      %s413 = smul.u32 4, %s24
      %p414 = scmp.lt.s32.totalorder %s413, 15
      %s415 = scalar_select %p414, %s413, 15
      %s416 = scalar_lea.vmem %s1, %s415
      %p417 = pneg %p71
      %p418 = pneg %p68
      %p419 = pneg %p92
      %p420 = pneg %p89
      %p421 = pneg %p113
      %p422 = pneg %p110
      %p423 = pneg %p134
      %p424 = pneg %p131
      %p425 = pneg %p155
      %p426 = pneg %p152
      %p427 = pneg %p176
      %p428 = pneg %p173
      %p429 = pneg %p197
      %p430 = pneg %p194
      %p431 = pneg %p218
      %p432 = pneg %p215
      %p433 = pneg %p239
      %p434 = pneg %p236
      %p435 = pneg %p260
      %p436 = pneg %p257
      %p437 = pneg %p281
      %p438 = pneg %p278
      %p439 = pneg %p302
      %p440 = pneg %p299
      %p441 = pneg %p328
      %p442 = pneg %p325
      %s443 = smul.u32 4, %s24
      %p444 = scmp.lt.s32.totalorder %s443, 15
      %s445 = scalar_select %p444, %s443, 15
      %s446 = smul.addr %s445, 2
      %s447 = smul.addr %s446, 8
      %s448 = scalar_lea.vmem %s13, %s447
      %s449 = smul.u32 4, %s24
      %p450 = scmp.lt.s32.totalorder %s449, 15
      %s451 = scalar_select %p450, %s449, 15
      %s452 = smul.addr %s451, 2
      %s453 = smul.addr %s452, 4
      %s454 = scalar_lea.vmem %s0, %s453
      %s455 = smul.u32 4, %s24
      %s456 = smul.u32 4, %s24
      %p457 = scmp.lt.s32.totalorder %s456, 15
      %s458 = scalar_select %p457, %s456, 15
      %s459 = scalar_lea.vmem %s1, %s458
      %s460 = smul.u32 4, %s24
      %s461 = smul.u32 4, %s24
      %p462 = scmp.lt.s32.totalorder %s461, 15
      %s463 = scalar_select %p462, %s461, 15
      %s464 = smul.addr %s463, 2
      %s465 = smul.addr %s464, 8
      %s466 = scalar_lea.vmem %s13, %s465
      %s467 = smul.u32 4, %s24
      %v469 = vld [vmem:[%s454] sm:$0xf]
      %v470 = vld [vmem:[%s454 + $0x4] sm:$0xf]
      %v471 = vld [vmem:[%s454 + $0x8] sm:$0xf]
      %v472 = vld [vmem:[%s454 + $0xc] sm:$0xf]
      %v473 = vld [vmem:[%s454 + $0x10] sm:$0xf]
      %v474 = vld [vmem:[%s454 + $0x14] sm:$0xf]
      %v475 = vld [vmem:[%s454 + $0x18] sm:$0xf]
      %v476 = vld [vmem:[%s454 + $0x1c] sm:$0xf]
      %v477 = vld [vmem:[%s2] sm:$0xf]
      %v478 = vld [vmem:[%s2 + $0x4] sm:$0xf]
      %v479 = vld [vmem:[%s2 + $0x8] sm:$0xf]
      %v480 = vld [vmem:[%s2 + $0xc] sm:$0xf]
      %v481 = vld [vmem:[%s2 + $0x10] sm:$0xf]
      %v482 = vld [vmem:[%s2 + $0x14] sm:$0xf]
      %v483 = vld [vmem:[%s2 + $0x18] sm:$0xf]
      %v484 = vld [vmem:[%s2 + $0x1c] sm:$0xf]
      %v485 = vld [vmem:[%s2 + $0x20] sm:$0xf]
      %v486 = vld [vmem:[%s2 + $0x24] sm:$0xf]
      %v487 = vld [vmem:[%s2 + $0x28] sm:$0xf]
      %v488 = vld [vmem:[%s2 + $0x2c] sm:$0xf]
      %v489 = vld [vmem:[%s2 + $0x30] sm:$0xf]
      %v490 = vld [vmem:[%s2 + $0x34] sm:$0xf]
      %v491 = vld [vmem:[%s2 + $0x38] sm:$0xf]
      %v492 = vld [vmem:[%s2 + $0x3c] sm:$0xf]
      %v493 = vld [vmem:[%s3] sm:$0x1]
      %v495 = vlaneseq
      %v496 = vshrl.u32 %v495, 7
      %v497 = vsub.s32 0, %v496
      %v498 = vrot.slane %v493, %v497
      %v508 = vunpack.c.l.b16 %v469
      %v509 = vunpack.c.l.b16 %v470
      %v510 = vunpack.c.l.b16 %v471
      %v511 = vunpack.c.l.b16 %v472
      %v512 = vunpack.c.l.b16 %v473
      %v513 = vunpack.c.l.b16 %v474
      %v514 = vunpack.c.l.b16 %v475
      %v515 = vunpack.c.l.b16 %v476
      %v516 = vpack.c.b16 %v509, %v508
      %v517 = vpack.c.b16 %v511, %v510
      %v518 = vpack.c.b16 %v513, %v512
      %v519 = vpack.c.b16 %v515, %v514
      %v540 = vunpack.c.l.b16 %v477
      %v541 = vunpack.c.l.b16 %v478
      %v542 = vunpack.c.l.b16 %v479
      %v543 = vunpack.c.l.b16 %v480
      %v544 = vunpack.c.l.b16 %v481
      %v545 = vunpack.c.l.b16 %v482
      %v546 = vunpack.c.l.b16 %v483
      %v547 = vunpack.c.l.b16 %v484
      %v548 = vunpack.c.l.b16 %v485
      %v549 = vunpack.c.l.b16 %v486
      %v550 = vunpack.c.l.b16 %v487
      %v551 = vunpack.c.l.b16 %v488
      %v552 = vunpack.c.l.b16 %v489
      %v553 = vunpack.c.l.b16 %v490
      %v554 = vunpack.c.l.b16 %v491
      %v555 = vunpack.c.l.b16 %v492
      %v556 = vpack.c.b16 %v541, %v540
      %v557 = vpack.c.b16 %v543, %v542
      %v558 = vpack.c.b16 %v545, %v544
      %v559 = vpack.c.b16 %v547, %v546
      %v560 = vpack.c.b16 %v549, %v548
      %v561 = vpack.c.b16 %v551, %v550
      %v562 = vpack.c.b16 %v553, %v552
      %v563 = vpack.c.b16 %v555, %v554
      %572 = vmatprep.subr.bf16.mxu0 0
      %573 = vmatpush1.bf16.msra.mxu0 %v563
      %574 = vmatprep.subr.bf16.mxu0 0
      %575 = vmatpush1.bf16.msra.mxu0 %v562
      %576 = vmatprep.subr.bf16.mxu0 0
      %577 = vmatpush1.bf16.msra.mxu0 %v561
      %578 = vmatprep.subr.bf16.mxu0 0
      %579 = vmatpush1.bf16.msra.mxu0 %v560
      %580 = vmatprep.subr.bf16.mxu0 0
      %581 = vmatpush1.bf16.msra.mxu0 %v559
      %582 = vmatprep.subr.bf16.mxu0 0
      %583 = vmatpush1.bf16.msra.mxu0 %v558
      %584 = vmatprep.subr.bf16.mxu0 0
      %585 = vmatpush1.bf16.msra.mxu0 %v557
      %586 = vmatprep.subr.bf16.mxu0 0
      %587 = vmatpush1.bf16.msra.mxu0 %v556
      %588 = vmatprep.subr.bf16.mxu0 0
      %589 = vmatpush2.bf16.msra.mxu0 0
      %590 = vmatprep.subr.bf16.mxu0 0
      %591 = vmatpush2.bf16.msra.mxu0 0
      %592 = vmatprep.subr.bf16.mxu0 0
      %593 = vmatpush2.bf16.msra.mxu0 0
      %594 = vmatprep.subr.bf16.mxu0 0
      %595 = vmatpush2.bf16.msra.mxu0 0
      %596 = vmatprep.subr.bf16.mxu0 0
      %597 = vmatpush2.bf16.msra.mxu0 0
      %598 = vmatprep.subr.bf16.mxu0 0
      %599 = vmatpush2.bf16.msra.mxu0 0
      %600 = vmatprep.subr.bf16.mxu0 0
      %601 = vmatpush2.bf16.msra.mxu0 0
      %602 = vmatprep.subr.bf16.mxu0 0
      %603 = vmatpush2.bf16.msra.mxu0 0
      %604 = vmatprep.mubr.bf16.mxu0 0
      %605 = vmatmul.mubr.bf16.gmra.mxu0 %v516
      %v606 = vpop.f32.mrf.mxu0
      %v607 = vadd.f32 %v498, %v606
      %v608 = vpop.f32.mrf.mxu0
      %v609 = vpop.f32.mrf.mxu0
      %v610 = vadd.f32 %v498, %v609
      %v611 = vpop.f32.mrf.mxu0
      %612 = vmatprep.mubr.bf16.mxu0 0
      %613 = vmatmul.mubr.bf16.gmra.mxu0 %v517
      %v614 = vpop.f32.mrf.mxu0
      %v615 = vadd.f32 %v498, %v614
      %v616 = vpop.f32.mrf.mxu0
      %v617 = vpop.f32.mrf.mxu0
      %v618 = vadd.f32 %v498, %v617
      %v619 = vpop.f32.mrf.mxu0
      %620 = vmatprep.mubr.bf16.mxu0 0
      %621 = vmatmul.mubr.bf16.gmra.mxu0 %v518
      %v622 = vpop.f32.mrf.mxu0
      %v623 = vadd.f32 %v498, %v622
      %v624 = vpop.f32.mrf.mxu0
      %v625 = vpop.f32.mrf.mxu0
      %v626 = vadd.f32 %v498, %v625
      %v627 = vpop.f32.mrf.mxu0
      %628 = vmatprep.mubr.bf16.mxu0 0
      %629 = vmatmul.mubr.bf16.gmra.mxu0 %v519
      %v630 = vpop.f32.mrf.mxu0
      %v631 = vadd.f32 %v498, %v630
      %v632 = vpop.f32.mrf.mxu0
      %v633 = vpop.f32.mrf.mxu0
      %v634 = vadd.f32 %v498, %v633
      %v635 = vpop.f32.mrf.mxu0
      %636 = vdwg.mxu0
      %v637 = vld [vmem:[%s10] sm:$0xff]
      %v638 = vld [vmem:[%s10 + $0x8] sm:$0xff]
      %v639 = vld [vmem:[%s10 + $0x10] sm:$0xff]
      %v640 = vld [vmem:[%s10 + $0x18] sm:$0xff]
      %v641 = vld [vmem:[%s10 + $0x20] sm:$0xff]
      %v642 = vld [vmem:[%s10 + $0x28] sm:$0xff]
      %v643 = vld [vmem:[%s10 + $0x30] sm:$0xff]
      %v644 = vld [vmem:[%s10 + $0x38] sm:$0xff]
      %v645 = vld [vmem:[%s10 + $0x40] sm:$0xff]
      %v646 = vld [vmem:[%s10 + $0x48] sm:$0xff]
      %v647 = vld [vmem:[%s10 + $0x50] sm:$0xff]
      %v648 = vld [vmem:[%s10 + $0x58] sm:$0xff]
      %v649 = vld [vmem:[%s10 + $0x60] sm:$0xff]
      %v650 = vld [vmem:[%s10 + $0x68] sm:$0xff]
      %v651 = vld [vmem:[%s10 + $0x70] sm:$0xff]
      %v652 = vld [vmem:[%s10 + $0x78] sm:$0xff]
      %v653 = vld [vmem:[%s4] sm:$0x1]
      %v654 = vld [vmem:[%s5] sm:$0x1]
      %v655 = vadd.f32 %v607, %v610
      %v656 = vrot.slane %v655, 4
      %v657 = vadd.f32 %v655, %v656
      %v658 = vrot.slane %v657, 2
      %v659 = vadd.f32 %v657, %v658
      %v660 = vrot.slane %v659, 1
      %v661 = vadd.f32 %v659, %v660
      %v662 = vadd.f32 %v615, %v618
      %v663 = vrot.slane %v662, 4
      %v664 = vadd.f32 %v662, %v663
      %v665 = vrot.slane %v664, 2
      %v666 = vadd.f32 %v664, %v665
      %v667 = vrot.slane %v666, 1
      %v668 = vadd.f32 %v666, %v667
      %v669 = vadd.f32 %v623, %v626
      %v670 = vrot.slane %v669, 4
      %v671 = vadd.f32 %v669, %v670
      %v672 = vrot.slane %v671, 2
      %v673 = vadd.f32 %v671, %v672
      %v674 = vrot.slane %v673, 1
      %v675 = vadd.f32 %v673, %v674
      %v676 = vadd.f32 %v631, %v634
      %v677 = vrot.slane %v676, 4
      %v678 = vadd.f32 %v676, %v677
      %v679 = vrot.slane %v678, 2
      %v680 = vadd.f32 %v678, %v679
      %v681 = vrot.slane %v680, 1
      %v682 = vadd.f32 %v680, %v681
      %vm687 = vcmask 1041409
      %v688 = vsel %vm687, %v668, %v661
      %vm689 = vcmask 1042434
      %v690 = vsel %vm689, %v675, %v688
      %vm691 = vcmask 1043459
      %v692 = vsel %vm691, %v682, %v690
      %694 = vmatprep.subr.mxu0 0.0
      %695 = vmatpush1.msra.mxu0 %v652
      %696 = vmatprep.subr.mxu0 0.0
      %697 = vmatpush1.msra.mxu0 %v651
      %698 = vmatprep.subr.mxu0 0.0
      %699 = vmatpush1.msra.mxu0 %v650
      %700 = vmatprep.subr.mxu0 0.0
      %701 = vmatpush1.msra.mxu0 %v649
      %702 = vmatprep.subr.mxu0 0.0
      %703 = vmatpush1.msra.mxu0 %v648
      %704 = vmatprep.subr.mxu0 0.0
      %705 = vmatpush1.msra.mxu0 %v647
      %706 = vmatprep.subr.mxu0 0.0
      %707 = vmatpush1.msra.mxu0 %v646
      %708 = vmatprep.subr.mxu0 0.0
      %709 = vmatpush1.msra.mxu0 %v645
      %710 = vmatprep.subr.mxu0 0.0
      %711 = vmatpush1.msra.mxu0 %v644
      %712 = vmatprep.subr.mxu0 0.0
      %713 = vmatpush1.msra.mxu0 %v643
      %714 = vmatprep.subr.mxu0 0.0
      %715 = vmatpush1.msra.mxu0 %v642
      %716 = vmatprep.subr.mxu0 0.0
      %717 = vmatpush1.msra.mxu0 %v641
      %718 = vmatprep.subr.mxu0 0.0
      %719 = vmatpush1.msra.mxu0 %v640
      %720 = vmatprep.subr.mxu0 0.0
      %721 = vmatpush1.msra.mxu0 %v639
      %722 = vmatprep.subr.mxu0 0.0
      %723 = vmatpush1.msra.mxu0 %v638
      %724 = vmatprep.subr.mxu0 0.0
      %725 = vmatpush1.msra.mxu0 %v637
      %726 = vmatprep.subr.mxu0 0.0
      %727 = vmatpush2.msra.mxu0 0.0
      %728 = vmatprep.subr.mxu0 0.0
      %729 = vmatpush2.msra.mxu0 0.0
      %730 = vmatprep.subr.mxu0 0.0
      %731 = vmatpush2.msra.mxu0 0.0
      %732 = vmatprep.subr.mxu0 0.0
      %733 = vmatpush2.msra.mxu0 0.0
      %734 = vmatprep.subr.mxu0 0.0
      %735 = vmatpush2.msra.mxu0 0.0
      %736 = vmatprep.subr.mxu0 0.0
      %737 = vmatpush2.msra.mxu0 0.0
      %738 = vmatprep.subr.mxu0 0.0
      %739 = vmatpush2.msra.mxu0 0.0
      %740 = vmatprep.subr.mxu0 0.0
      %741 = vmatpush2.msra.mxu0 0.0
      %742 = vmatprep.subr.mxu0 0.0
      %743 = vmatpush2.msra.mxu0 0.0
      %744 = vmatprep.subr.mxu0 0.0
      %745 = vmatpush2.msra.mxu0 0.0
      %746 = vmatprep.subr.mxu0 0.0
      %747 = vmatpush2.msra.mxu0 0.0
      %748 = vmatprep.subr.mxu0 0.0
      %749 = vmatpush2.msra.mxu0 0.0
      %750 = vmatprep.subr.mxu0 0.0
      %751 = vmatpush2.msra.mxu0 0.0
      %752 = vmatprep.subr.mxu0 0.0
      %753 = vmatpush2.msra.mxu0 0.0
      %754 = vmatprep.subr.mxu0 0.0
      %755 = vmatpush2.msra.mxu0 0.0
      %756 = vmatprep.subr.mxu0 0.0
      %757 = vmatpush2.msra.mxu0 0.0
      %758 = vmatprep.mubr.f32.mxu0 0.0
      %759 = vmatmul.mubr.f32.gmra.mxu0 %v692
      %v760 = vpop.f32.mrf.mxu0
      %v761 = vadd.f32 0.0, %v760
      %v762 = vpop.f32.mrf.mxu0
      %763 = vdwg.mxu0
      %v766 = vunpack.c.l.s4 1966171168
      %v767 = vunpack.c.0.s8 %v766
      %v768 = vlaneseq
      %v769 = vshrl.u32 %v768, 7
      %v770 = vsub.s32 %v767, %v769
      %v771 = vrot.slane %v761, %v770
      %v772 = vcombine.high %v771, %v771
      %v774 = vunpack.c.l.s4 1966171168
      %v775 = vunpack.c.0.s8 %v774
      %v776 = vlaneseq
      %v777 = vshrl.u32 %v776, 7
      %v778 = vsub.s32 %v775, %v777
      %v779 = vrot.slane %v771, %v778
      %v781 = vunpack.c.l.s4 1966171168
      %v782 = vunpack.c.0.s8 %v781
      %v783 = vlaneseq
      %v784 = vshrl.u32 %v783, 7
      %v785 = vsub.s32 %v782, %v784
      %v786 = vrot.slane %v772, %v785
      %v787 = vcombine.high %v779, %v779
      %v788 = vcombine.high %v786, %v786
      %v789 = vlaneseq
      %v790 = vshrl.u32 %v789, 7
      %v791 = vsub.s32 0, %v790
      %v792 = vrot.slane %v779, %v791
      %v793 = vlaneseq
      %v794 = vshrl.u32 %v793, 7
      %v795 = vsub.s32 0, %v794
      %v796 = vrot.slane %v786, %v795
      %v797 = vlaneseq
      %v798 = vshrl.u32 %v797, 7
      %v799 = vsub.s32 0, %v798
      %v800 = vrot.slane %v787, %v799
      %v801 = vlaneseq
      %v802 = vshrl.u32 %v801, 7
      %v803 = vsub.s32 0, %v802
      %v804 = vrot.slane %v788, %v803
      %v809 = vsub.f32 %v607, %v792
      %v810 = vsub.f32 %v610, %v792
      %v811 = vsub.f32 %v615, %v796
      %v812 = vsub.f32 %v618, %v796
      %v813 = vsub.f32 %v623, %v800
      %v814 = vsub.f32 %v626, %v800
      %v815 = vsub.f32 %v631, %v804
      %v816 = vsub.f32 %v634, %v804
      %v817 = vmul.f32 %v809, %v809
      %v818 = vmul.f32 %v810, %v810
      %v819 = vmul.f32 %v811, %v811
      %v820 = vmul.f32 %v812, %v812
      %v821 = vmul.f32 %v813, %v813
      %v822 = vmul.f32 %v814, %v814
      %v823 = vmul.f32 %v815, %v815
      %v824 = vmul.f32 %v816, %v816
      %v825 = vadd.f32 %v817, %v818
      %v826 = vrot.slane %v825, 4
      %v827 = vadd.f32 %v825, %v826
      %v828 = vrot.slane %v827, 2
      %v829 = vadd.f32 %v827, %v828
      %v830 = vrot.slane %v829, 1
      %v831 = vadd.f32 %v829, %v830
      %v832 = vadd.f32 %v819, %v820
      %v833 = vrot.slane %v832, 4
      %v834 = vadd.f32 %v832, %v833
      %v835 = vrot.slane %v834, 2
      %v836 = vadd.f32 %v834, %v835
      %v837 = vrot.slane %v836, 1
      %v838 = vadd.f32 %v836, %v837
      %v839 = vadd.f32 %v821, %v822
      %v840 = vrot.slane %v839, 4
      %v841 = vadd.f32 %v839, %v840
      %v842 = vrot.slane %v841, 2
      %v843 = vadd.f32 %v841, %v842
      %v844 = vrot.slane %v843, 1
      %v845 = vadd.f32 %v843, %v844
      %v846 = vadd.f32 %v823, %v824
      %v847 = vrot.slane %v846, 4
      %v848 = vadd.f32 %v846, %v847
      %v849 = vrot.slane %v848, 2
      %v850 = vadd.f32 %v848, %v849
      %v851 = vrot.slane %v850, 1
      %v852 = vadd.f32 %v850, %v851
      %v857 = vsel %vm687, %v838, %v831
      %v858 = vsel %vm689, %v845, %v857
      %v859 = vsel %vm691, %v852, %v858
      %861 = vmatprep.subr.mxu0 0.0
      %862 = vmatpush1.msra.mxu0 %v652
      %863 = vmatprep.subr.mxu0 0.0
      %864 = vmatpush1.msra.mxu0 %v651
      %865 = vmatprep.subr.mxu0 0.0
      %866 = vmatpush1.msra.mxu0 %v650
      %867 = vmatprep.subr.mxu0 0.0
      %868 = vmatpush1.msra.mxu0 %v649
      %869 = vmatprep.subr.mxu0 0.0
      %870 = vmatpush1.msra.mxu0 %v648
      %871 = vmatprep.subr.mxu0 0.0
      %872 = vmatpush1.msra.mxu0 %v647
      %873 = vmatprep.subr.mxu0 0.0
      %874 = vmatpush1.msra.mxu0 %v646
      %875 = vmatprep.subr.mxu0 0.0
      %876 = vmatpush1.msra.mxu0 %v645
      %877 = vmatprep.subr.mxu0 0.0
      %878 = vmatpush1.msra.mxu0 %v644
      %879 = vmatprep.subr.mxu0 0.0
      %880 = vmatpush1.msra.mxu0 %v643
      %881 = vmatprep.subr.mxu0 0.0
      %882 = vmatpush1.msra.mxu0 %v642
      %883 = vmatprep.subr.mxu0 0.0
      %884 = vmatpush1.msra.mxu0 %v641
      %885 = vmatprep.subr.mxu0 0.0
      %886 = vmatpush1.msra.mxu0 %v640
      %887 = vmatprep.subr.mxu0 0.0
      %888 = vmatpush1.msra.mxu0 %v639
      %889 = vmatprep.subr.mxu0 0.0
      %890 = vmatpush1.msra.mxu0 %v638
      %891 = vmatprep.subr.mxu0 0.0
      %892 = vmatpush1.msra.mxu0 %v637
      %893 = vmatprep.subr.mxu0 0.0
      %894 = vmatpush2.msra.mxu0 0.0
      %895 = vmatprep.subr.mxu0 0.0
      %896 = vmatpush2.msra.mxu0 0.0
      %897 = vmatprep.subr.mxu0 0.0
      %898 = vmatpush2.msra.mxu0 0.0
      %899 = vmatprep.subr.mxu0 0.0
      %900 = vmatpush2.msra.mxu0 0.0
      %901 = vmatprep.subr.mxu0 0.0
      %902 = vmatpush2.msra.mxu0 0.0
      %903 = vmatprep.subr.mxu0 0.0
      %904 = vmatpush2.msra.mxu0 0.0
      %905 = vmatprep.subr.mxu0 0.0
      %906 = vmatpush2.msra.mxu0 0.0
      %907 = vmatprep.subr.mxu0 0.0
      %908 = vmatpush2.msra.mxu0 0.0
      %909 = vmatprep.subr.mxu0 0.0
      %910 = vmatpush2.msra.mxu0 0.0
      %911 = vmatprep.subr.mxu0 0.0
      %912 = vmatpush2.msra.mxu0 0.0
      %913 = vmatprep.subr.mxu0 0.0
      %914 = vmatpush2.msra.mxu0 0.0
      %915 = vmatprep.subr.mxu0 0.0
      %916 = vmatpush2.msra.mxu0 0.0
      %917 = vmatprep.subr.mxu0 0.0
      %918 = vmatpush2.msra.mxu0 0.0
      %919 = vmatprep.subr.mxu0 0.0
      %920 = vmatpush2.msra.mxu0 0.0
      %921 = vmatprep.subr.mxu0 0.0
      %922 = vmatpush2.msra.mxu0 0.0
      %923 = vmatprep.subr.mxu0 0.0
      %924 = vmatpush2.msra.mxu0 0.0
      %925 = vmatprep.mubr.f32.mxu0 0.0
      %926 = vmatmul.mubr.f32.gmra.mxu0 %v859
      %v927 = vpop.f32.mrf.mxu0
      %v928 = vadd.f32 1e-05, %v927
      %v929 = vpop.f32.mrf.mxu0
      %930 = vdwg.mxu0
      %v931 = vrsqrt.pop %v928
      %v933 = vlaneseq
      %v934 = vshrl.u32 %v933, 7
      %v935 = vsub.s32 0, %v934
      %v936 = vrot.slane %v653, %v935
      %v938 = vmul.f32 %v931, %v936
      %v941 = vunpack.c.l.s4 1966171168
      %v942 = vunpack.c.0.s8 %v941
      %v943 = vlaneseq
      %v944 = vshrl.u32 %v943, 7
      %v945 = vsub.s32 %v942, %v944
      %v946 = vrot.slane %v938, %v945
      %v947 = vcombine.high %v946, %v946
      %v949 = vunpack.c.l.s4 1966171168
      %v950 = vunpack.c.0.s8 %v949
      %v951 = vlaneseq
      %v952 = vshrl.u32 %v951, 7
      %v953 = vsub.s32 %v950, %v952
      %v954 = vrot.slane %v946, %v953
      %v956 = vunpack.c.l.s4 1966171168
      %v957 = vunpack.c.0.s8 %v956
      %v958 = vlaneseq
      %v959 = vshrl.u32 %v958, 7
      %v960 = vsub.s32 %v957, %v959
      %v961 = vrot.slane %v947, %v960
      %v962 = vcombine.high %v954, %v954
      %v963 = vcombine.high %v961, %v961
      %v964 = vlaneseq
      %v965 = vshrl.u32 %v964, 7
      %v966 = vsub.s32 0, %v965
      %v967 = vrot.slane %v954, %v966
      %v968 = vlaneseq
      %v969 = vshrl.u32 %v968, 7
      %v970 = vsub.s32 0, %v969
      %v971 = vrot.slane %v961, %v970
      %v972 = vlaneseq
      %v973 = vshrl.u32 %v972, 7
      %v974 = vsub.s32 0, %v973
      %v975 = vrot.slane %v962, %v974
      %v976 = vlaneseq
      %v977 = vshrl.u32 %v976, 7
      %v978 = vsub.s32 0, %v977
      %v979 = vrot.slane %v963, %v978
      %v984 = vmul.f32 %v809, %v967
      %v985 = vmul.f32 %v810, %v967
      %v986 = vmul.f32 %v811, %v971
      %v987 = vmul.f32 %v812, %v971
      %v988 = vmul.f32 %v813, %v975
      %v989 = vmul.f32 %v814, %v975
      %v990 = vmul.f32 %v815, %v979
      %v991 = vmul.f32 %v816, %v979
      %v993 = vlaneseq
      %v994 = vshrl.u32 %v993, 7
      %v995 = vsub.s32 0, %v994
      %v996 = vrot.slane %v654, %v995
      %v998 = vadd.f32 %v984, %v996
      %v999 = vadd.f32 %v985, %v996
      %v1000 = vadd.f32 %v986, %v996
      %v1001 = vadd.f32 %v987, %v996
      %v1002 = vadd.f32 %v988, %v996
      %v1003 = vadd.f32 %v989, %v996
      %v1004 = vadd.f32 %v990, %v996
      %v1005 = vadd.f32 %v991, %v996
      %v1006 = vxor.u32 %v998, 2147483648
      %v1007 = vxor.u32 %v999, 2147483648
      %v1008 = vxor.u32 %v1000, 2147483648
      %v1009 = vxor.u32 %v1001, 2147483648
      %v1010 = vxor.u32 %v1002, 2147483648
      %v1011 = vxor.u32 %v1003, 2147483648
      %v1012 = vxor.u32 %v1004, 2147483648
      %v1013 = vxor.u32 %v1005, 2147483648
      %v1014 = vmul.f32 %v1006, 1.442695
      %v1015 = vpow.pop %v1014
      %v1016 = vmul.f32 %v1007, 1.442695
      %v1017 = vpow.pop %v1016
      %v1018 = vmul.f32 %v1008, 1.442695
      %v1019 = vpow.pop %v1018
      %v1020 = vmul.f32 %v1009, 1.442695
      %v1021 = vpow.pop %v1020
      %v1022 = vmul.f32 %v1010, 1.442695
      %v1023 = vpow.pop %v1022
      %v1024 = vmul.f32 %v1011, 1.442695
      %v1025 = vpow.pop %v1024
      %v1026 = vmul.f32 %v1012, 1.442695
      %v1027 = vpow.pop %v1026
      %v1028 = vmul.f32 %v1013, 1.442695
      %v1029 = vpow.pop %v1028
      %v1030 = vadd.f32 %v1015, 1.0
      %v1031 = vadd.f32 %v1017, 1.0
      %v1032 = vadd.f32 %v1019, 1.0
      %v1033 = vadd.f32 %v1021, 1.0
      %v1034 = vadd.f32 %v1023, 1.0
      %v1035 = vadd.f32 %v1025, 1.0
      %v1036 = vadd.f32 %v1027, 1.0
      %v1037 = vadd.f32 %v1029, 1.0
      %v1038 = vrcp.pop %v1030
      %v1039 = vmul.f32 1.0, %v1038
      %v1040 = vrcp.pop %v1031
      %v1041 = vmul.f32 1.0, %v1040
      %v1042 = vrcp.pop %v1032
      %v1043 = vmul.f32 1.0, %v1042
      %v1044 = vrcp.pop %v1033
      %v1045 = vmul.f32 1.0, %v1044
      %v1046 = vrcp.pop %v1034
      %v1047 = vmul.f32 1.0, %v1046
      %v1048 = vrcp.pop %v1035
      %v1049 = vmul.f32 1.0, %v1048
      %v1050 = vrcp.pop %v1036
      %v1051 = vmul.f32 1.0, %v1050
      %v1052 = vrcp.pop %v1037
      %v1053 = vmul.f32 1.0, %v1052
      %v1054 = vmul.f32 %v998, %v1039
      %v1055 = vmul.f32 %v999, %v1041
      %v1056 = vmul.f32 %v1000, %v1043
      %v1057 = vmul.f32 %v1001, %v1045
      %v1058 = vmul.f32 %v1002, %v1047
      %v1059 = vmul.f32 %v1003, %v1049
      %v1060 = vmul.f32 %v1004, %v1051
      %v1061 = vmul.f32 %v1005, %v1053
      %v1062 = vld [vmem:[%s7] sm:$0x1]
      %v1063 = vld [vmem:[%s11] sm:$0xff]
      %v1064 = vld [vmem:[%s11 + $0x8] sm:$0xff]
      %v1065 = vld [vmem:[%s11 + $0x10] sm:$0xff]
      %v1066 = vld [vmem:[%s11 + $0x18] sm:$0xff]
      %v1067 = vld [vmem:[%s11 + $0x20] sm:$0xff]
      %v1068 = vld [vmem:[%s11 + $0x28] sm:$0xff]
      %v1069 = vld [vmem:[%s11 + $0x30] sm:$0xff]
      %v1070 = vld [vmem:[%s11 + $0x38] sm:$0xff]
      %v1071 = vld [vmem:[%s12] sm:$0xff]
      %v1072 = vld [vmem:[%s12 + $0x8] sm:$0xff]
      %v1073 = vld [vmem:[%s12 + $0x10] sm:$0xff]
      %v1074 = vld [vmem:[%s12 + $0x18] sm:$0xff]
      %v1075 = vld [vmem:[%s12 + $0x20] sm:$0xff]
      %v1076 = vld [vmem:[%s12 + $0x28] sm:$0xff]
      %v1077 = vld [vmem:[%s12 + $0x30] sm:$0xff]
      %v1078 = vld [vmem:[%s12 + $0x38] sm:$0xff]
      %v1079 = vrot.slane %v1054, 7
      %v1080 = vrot.slane %v1055, 7
      %v1081 = vrot.slane %v1056, 7
      %v1082 = vrot.slane %v1057, 7
      %v1083 = vrot.slane %v1058, 7
      %v1084 = vrot.slane %v1059, 7
      %v1085 = vrot.slane %v1060, 7
      %v1086 = vrot.slane %v1061, 7
      %v1087 = vlaneseq
      %v1088 = vshrl.u32 %v1087, 7
      %vm1089 = vcmp.lt.s32.totalorder %v1088, 1
      %v1090 = vsel %vm1089, %v1085, %v1086
      %v1091 = vsel %vm1089, %v1084, %v1085
      %v1092 = vsel %vm1089, %v1083, %v1084
      %v1093 = vsel %vm1089, %v1082, %v1083
      %v1094 = vsel %vm1089, %v1081, %v1082
      %v1095 = vsel %vm1089, %v1080, %v1081
      %v1096 = vsel %vm1089, %v1079, %v1080
      %v1097 = vsel %vm1089, %v1086, %v1079
      %1099 = vset.pattern.permute.xlu0 0
      %1100 = vperm.xlu0 %1099, %v1063
      %v1101 = vpop.permute.xlu0 %1100
      %1104 = vset.pattern.permute.xlu0 0
      %1105 = vperm.xlu0 %1104, %v1064
      %v1106 = vpop.permute.xlu0 %1105
      %1109 = vset.pattern.permute.xlu0 0
      %1110 = vperm.xlu0 %1109, %v1065
      %v1111 = vpop.permute.xlu0 %1110
      %1114 = vset.pattern.permute.xlu0 0
      %1115 = vperm.xlu0 %1114, %v1066
      %v1116 = vpop.permute.xlu0 %1115
      %1119 = vset.pattern.permute.xlu0 0
      %1120 = vperm.xlu0 %1119, %v1067
      %v1121 = vpop.permute.xlu0 %1120
      %1124 = vset.pattern.permute.xlu0 0
      %1125 = vperm.xlu0 %1124, %v1068
      %v1126 = vpop.permute.xlu0 %1125
      %1129 = vset.pattern.permute.xlu0 0
      %1130 = vperm.xlu0 %1129, %v1069
      %v1131 = vpop.permute.xlu0 %1130
      %1134 = vset.pattern.permute.xlu0 0
      %1135 = vperm.xlu0 %1134, %v1070
      %v1136 = vpop.permute.xlu0 %1135
      %v1138 = vmul.f32 %v1097, %v1101
      %v1139 = vmul.f32 %v1096, %v1106
      %v1140 = vmul.f32 %v1095, %v1111
      %v1141 = vmul.f32 %v1094, %v1116
      %v1142 = vmul.f32 %v1093, %v1121
      %v1143 = vmul.f32 %v1092, %v1126
      %v1144 = vmul.f32 %v1091, %v1131
      %v1145 = vmul.f32 %v1090, %v1136
      %v1146 = vrot.slane %v1054, 1
      %v1147 = vrot.slane %v1055, 1
      %v1148 = vrot.slane %v1056, 1
      %v1149 = vrot.slane %v1057, 1
      %v1150 = vrot.slane %v1058, 1
      %v1151 = vrot.slane %v1059, 1
      %v1152 = vrot.slane %v1060, 1
      %v1153 = vrot.slane %v1061, 1
      %vm1154 = vcmp.lt.s32.totalorder %v1088, 7
      %v1155 = vsel %vm1154, %v1152, %v1153
      %v1156 = vsel %vm1154, %v1151, %v1152
      %v1157 = vsel %vm1154, %v1150, %v1151
      %v1158 = vsel %vm1154, %v1149, %v1150
      %v1159 = vsel %vm1154, %v1148, %v1149
      %v1160 = vsel %vm1154, %v1147, %v1148
      %v1161 = vsel %vm1154, %v1146, %v1147
      %v1162 = vsel %vm1154, %v1153, %v1146
      %1164 = vset.pattern.permute.xlu0 0
      %1165 = vperm.xlu0 %1164, %v1071
      %v1166 = vpop.permute.xlu0 %1165
      %1169 = vset.pattern.permute.xlu0 0
      %1170 = vperm.xlu0 %1169, %v1072
      %v1171 = vpop.permute.xlu0 %1170
      %1174 = vset.pattern.permute.xlu0 0
      %1175 = vperm.xlu0 %1174, %v1073
      %v1176 = vpop.permute.xlu0 %1175
      %1179 = vset.pattern.permute.xlu0 0
      %1180 = vperm.xlu0 %1179, %v1074
      %v1181 = vpop.permute.xlu0 %1180
      %1184 = vset.pattern.permute.xlu0 0
      %1185 = vperm.xlu0 %1184, %v1075
      %v1186 = vpop.permute.xlu0 %1185
      %1189 = vset.pattern.permute.xlu0 0
      %1190 = vperm.xlu0 %1189, %v1076
      %v1191 = vpop.permute.xlu0 %1190
      %1194 = vset.pattern.permute.xlu0 0
      %1195 = vperm.xlu0 %1194, %v1077
      %v1196 = vpop.permute.xlu0 %1195
      %1199 = vset.pattern.permute.xlu0 0
      %1200 = vperm.xlu0 %1199, %v1078
      %v1201 = vpop.permute.xlu0 %1200
      %v1203 = vmul.f32 %v1161, %v1166
      %v1204 = vmul.f32 %v1160, %v1171
      %v1205 = vmul.f32 %v1159, %v1176
      %v1206 = vmul.f32 %v1158, %v1181
      %v1207 = vmul.f32 %v1157, %v1186
      %v1208 = vmul.f32 %v1156, %v1191
      %v1209 = vmul.f32 %v1155, %v1196
      %v1210 = vmul.f32 %v1162, %v1201
      %v1211 = vpack.c.bf16 %v1139, %v1138
      %v1212 = vpack.c.bf16 %v1141, %v1140
      %v1213 = vpack.c.bf16 %v1143, %v1142
      %v1214 = vpack.c.bf16 %v1145, %v1144
      %v1215 = vld [vmem:[%s6] sm:$0xf]
      %v1216 = vld [vmem:[%s6 + $0x4] sm:$0xf]
      %v1217 = vld [vmem:[%s6 + $0x8] sm:$0xf]
      %v1218 = vld [vmem:[%s6 + $0xc] sm:$0xf]
      %v1219 = vld [vmem:[%s6 + $0x10] sm:$0xf]
      %v1220 = vld [vmem:[%s6 + $0x14] sm:$0xf]
      %v1221 = vld [vmem:[%s6 + $0x18] sm:$0xf]
      %v1222 = vld [vmem:[%s6 + $0x1c] sm:$0xf]
      %v1223 = vld [vmem:[%s6 + $0x20] sm:$0xf]
      %v1224 = vld [vmem:[%s6 + $0x24] sm:$0xf]
      %v1225 = vld [vmem:[%s6 + $0x28] sm:$0xf]
      %v1226 = vld [vmem:[%s6 + $0x2c] sm:$0xf]
      %v1227 = vld [vmem:[%s6 + $0x30] sm:$0xf]
      %v1228 = vld [vmem:[%s6 + $0x34] sm:$0xf]
      %v1229 = vld [vmem:[%s6 + $0x38] sm:$0xf]
      %v1230 = vld [vmem:[%s6 + $0x3c] sm:$0xf]
      %v1231 = vpack.c.bf16 %v1055, %v1054
      %v1232 = vpack.c.bf16 %v1057, %v1056
      %v1233 = vpack.c.bf16 %v1059, %v1058
      %v1234 = vpack.c.bf16 %v1061, %v1060
      %s1235 = scalar_lea.vmem %s6, 64
      %v1236 = vld [vmem:[%s1235] sm:$0xf]
      %v1237 = vld [vmem:[%s1235 + $0x4] sm:$0xf]
      %v1238 = vld [vmem:[%s1235 + $0x8] sm:$0xf]
      %v1239 = vld [vmem:[%s1235 + $0xc] sm:$0xf]
      %v1240 = vld [vmem:[%s1235 + $0x10] sm:$0xf]
      %v1241 = vld [vmem:[%s1235 + $0x14] sm:$0xf]
      %v1242 = vld [vmem:[%s1235 + $0x18] sm:$0xf]
      %v1243 = vld [vmem:[%s1235 + $0x1c] sm:$0xf]
      %v1244 = vld [vmem:[%s1235 + $0x20] sm:$0xf]
      %v1245 = vld [vmem:[%s1235 + $0x24] sm:$0xf]
      %v1246 = vld [vmem:[%s1235 + $0x28] sm:$0xf]
      %v1247 = vld [vmem:[%s1235 + $0x2c] sm:$0xf]
      %v1248 = vld [vmem:[%s1235 + $0x30] sm:$0xf]
      %v1249 = vld [vmem:[%s1235 + $0x34] sm:$0xf]
      %v1250 = vld [vmem:[%s1235 + $0x38] sm:$0xf]
      %v1251 = vld [vmem:[%s1235 + $0x3c] sm:$0xf]
      %v1268 = vunpack.c.l.b16 %v1236
      %v1269 = vunpack.c.l.b16 %v1237
      %v1270 = vunpack.c.l.b16 %v1238
      %v1271 = vunpack.c.l.b16 %v1239
      %v1272 = vunpack.c.l.b16 %v1240
      %v1273 = vunpack.c.l.b16 %v1241
      %v1274 = vunpack.c.l.b16 %v1242
      %v1275 = vunpack.c.l.b16 %v1243
      %v1276 = vunpack.c.l.b16 %v1244
      %v1277 = vunpack.c.l.b16 %v1245
      %v1278 = vunpack.c.l.b16 %v1246
      %v1279 = vunpack.c.l.b16 %v1247
      %v1280 = vunpack.c.l.b16 %v1248
      %v1281 = vunpack.c.l.b16 %v1249
      %v1282 = vunpack.c.l.b16 %v1250
      %v1283 = vunpack.c.l.b16 %v1251
      %v1284 = vpack.c.b16 %v1269, %v1268
      %v1285 = vpack.c.b16 %v1271, %v1270
      %v1286 = vpack.c.b16 %v1273, %v1272
      %v1287 = vpack.c.b16 %v1275, %v1274
      %v1288 = vpack.c.b16 %v1277, %v1276
      %v1289 = vpack.c.b16 %v1279, %v1278
      %v1290 = vpack.c.b16 %v1281, %v1280
      %v1291 = vpack.c.b16 %v1283, %v1282
      %1300 = vmatprep.subr.bf16.mxu0 0
      %1301 = vmatpush1.bf16.msra.mxu0 %v1291
      %1302 = vmatprep.subr.bf16.mxu0 0
      %1303 = vmatpush1.bf16.msra.mxu0 %v1290
      %1304 = vmatprep.subr.bf16.mxu0 0
      %1305 = vmatpush1.bf16.msra.mxu0 %v1289
      %1306 = vmatprep.subr.bf16.mxu0 0
      %1307 = vmatpush1.bf16.msra.mxu0 %v1288
      %1308 = vmatprep.subr.bf16.mxu0 0
      %1309 = vmatpush1.bf16.msra.mxu0 %v1287
      %1310 = vmatprep.subr.bf16.mxu0 0
      %1311 = vmatpush1.bf16.msra.mxu0 %v1286
      %1312 = vmatprep.subr.bf16.mxu0 0
      %1313 = vmatpush1.bf16.msra.mxu0 %v1285
      %1314 = vmatprep.subr.bf16.mxu0 0
      %1315 = vmatpush1.bf16.msra.mxu0 %v1284
      %1316 = vmatprep.subr.bf16.mxu0 0
      %1317 = vmatpush2.bf16.msra.mxu0 0
      %1318 = vmatprep.subr.bf16.mxu0 0
      %1319 = vmatpush2.bf16.msra.mxu0 0
      %1320 = vmatprep.subr.bf16.mxu0 0
      %1321 = vmatpush2.bf16.msra.mxu0 0
      %1322 = vmatprep.subr.bf16.mxu0 0
      %1323 = vmatpush2.bf16.msra.mxu0 0
      %1324 = vmatprep.subr.bf16.mxu0 0
      %1325 = vmatpush2.bf16.msra.mxu0 0
      %1326 = vmatprep.subr.bf16.mxu0 0
      %1327 = vmatpush2.bf16.msra.mxu0 0
      %1328 = vmatprep.subr.bf16.mxu0 0
      %1329 = vmatpush2.bf16.msra.mxu0 0
      %1330 = vmatprep.subr.bf16.mxu0 0
      %1331 = vmatpush2.bf16.msra.mxu0 0
      %1332 = vmatprep.mubr.bf16.mxu0 0
      %1333 = vmatmul.mubr.bf16.gmra.mxu0 %v1231
      %v1334 = vpop.f32.mrf.mxu0
      %v1335 = vadd.f32 0.0, %v1334
      %v1336 = vpop.f32.mrf.mxu0
      %v1337 = vpop.f32.mrf.mxu0
      %v1338 = vadd.f32 0.0, %v1337
      %v1339 = vpop.f32.mrf.mxu0
      %1340 = vmatprep.mubr.bf16.mxu0 0
      %1341 = vmatmul.mubr.bf16.gmra.mxu0 %v1232
      %v1342 = vpop.f32.mrf.mxu0
      %v1343 = vadd.f32 0.0, %v1342
      %v1344 = vpop.f32.mrf.mxu0
      %v1345 = vpop.f32.mrf.mxu0
      %v1346 = vadd.f32 0.0, %v1345
      %v1347 = vpop.f32.mrf.mxu0
      %1348 = vmatprep.mubr.bf16.mxu0 0
      %1349 = vmatmul.mubr.bf16.gmra.mxu0 %v1233
      %v1350 = vpop.f32.mrf.mxu0
      %v1351 = vadd.f32 0.0, %v1350
      %v1352 = vpop.f32.mrf.mxu0
      %v1353 = vpop.f32.mrf.mxu0
      %v1354 = vadd.f32 0.0, %v1353
      %v1355 = vpop.f32.mrf.mxu0
      %1356 = vmatprep.mubr.bf16.mxu0 0
      %1357 = vmatmul.mubr.bf16.gmra.mxu0 %v1234
      %v1358 = vpop.f32.mrf.mxu0
      %v1359 = vadd.f32 0.0, %v1358
      %v1360 = vpop.f32.mrf.mxu0
      %v1361 = vpop.f32.mrf.mxu0
      %v1362 = vadd.f32 0.0, %v1361
      %v1363 = vpop.f32.mrf.mxu0
      %1364 = vdwg.mxu0
      %v1381 = vunpack.c.l.b16 %v1215
      %v1382 = vunpack.c.l.b16 %v1216
      %v1383 = vunpack.c.l.b16 %v1217
      %v1384 = vunpack.c.l.b16 %v1218
      %v1385 = vunpack.c.l.b16 %v1219
      %v1386 = vunpack.c.l.b16 %v1220
      %v1387 = vunpack.c.l.b16 %v1221
      %v1388 = vunpack.c.l.b16 %v1222
      %v1389 = vunpack.c.l.b16 %v1223
      %v1390 = vunpack.c.l.b16 %v1224
      %v1391 = vunpack.c.l.b16 %v1225
      %v1392 = vunpack.c.l.b16 %v1226
      %v1393 = vunpack.c.l.b16 %v1227
      %v1394 = vunpack.c.l.b16 %v1228
      %v1395 = vunpack.c.l.b16 %v1229
      %v1396 = vunpack.c.l.b16 %v1230
      %v1397 = vpack.c.b16 %v1382, %v1381
      %v1398 = vpack.c.b16 %v1384, %v1383
      %v1399 = vpack.c.b16 %v1386, %v1385
      %v1400 = vpack.c.b16 %v1388, %v1387
      %v1401 = vpack.c.b16 %v1390, %v1389
      %v1402 = vpack.c.b16 %v1392, %v1391
      %v1403 = vpack.c.b16 %v1394, %v1393
      %v1404 = vpack.c.b16 %v1396, %v1395
      %1413 = vmatprep.subr.bf16.mxu0 0
      %1414 = vmatpush1.bf16.msra.mxu0 %v1404
      %1415 = vmatprep.subr.bf16.mxu0 0
      %1416 = vmatpush1.bf16.msra.mxu0 %v1403
      %1417 = vmatprep.subr.bf16.mxu0 0
      %1418 = vmatpush1.bf16.msra.mxu0 %v1402
      %1419 = vmatprep.subr.bf16.mxu0 0
      %1420 = vmatpush1.bf16.msra.mxu0 %v1401
      %1421 = vmatprep.subr.bf16.mxu0 0
      %1422 = vmatpush1.bf16.msra.mxu0 %v1400
      %1423 = vmatprep.subr.bf16.mxu0 0
      %1424 = vmatpush1.bf16.msra.mxu0 %v1399
      %1425 = vmatprep.subr.bf16.mxu0 0
      %1426 = vmatpush1.bf16.msra.mxu0 %v1398
      %1427 = vmatprep.subr.bf16.mxu0 0
      %1428 = vmatpush1.bf16.msra.mxu0 %v1397
      %1429 = vmatprep.subr.bf16.mxu0 0
      %1430 = vmatpush2.bf16.msra.mxu0 0
      %1431 = vmatprep.subr.bf16.mxu0 0
      %1432 = vmatpush2.bf16.msra.mxu0 0
      %1433 = vmatprep.subr.bf16.mxu0 0
      %1434 = vmatpush2.bf16.msra.mxu0 0
      %1435 = vmatprep.subr.bf16.mxu0 0
      %1436 = vmatpush2.bf16.msra.mxu0 0
      %1437 = vmatprep.subr.bf16.mxu0 0
      %1438 = vmatpush2.bf16.msra.mxu0 0
      %1439 = vmatprep.subr.bf16.mxu0 0
      %1440 = vmatpush2.bf16.msra.mxu0 0
      %1441 = vmatprep.subr.bf16.mxu0 0
      %1442 = vmatpush2.bf16.msra.mxu0 0
      %1443 = vmatprep.subr.bf16.mxu0 0
      %1444 = vmatpush2.bf16.msra.mxu0 0
      %1445 = vmatprep.mubr.bf16.mxu0 0
      %1446 = vmatmul.mubr.bf16.gmra.mxu0 %v1211
      %v1447 = vpop.f32.mrf.mxu0
      %v1448 = vadd.f32 %v1335, %v1447
      %v1449 = vpop.f32.mrf.mxu0
      %v1450 = vpop.f32.mrf.mxu0
      %v1451 = vadd.f32 %v1338, %v1450
      %v1452 = vpop.f32.mrf.mxu0
      %1453 = vmatprep.mubr.bf16.mxu0 0
      %1454 = vmatmul.mubr.bf16.gmra.mxu0 %v1212
      %v1455 = vpop.f32.mrf.mxu0
      %v1456 = vadd.f32 %v1343, %v1455
      %v1457 = vpop.f32.mrf.mxu0
      %v1458 = vpop.f32.mrf.mxu0
      %v1459 = vadd.f32 %v1346, %v1458
      %v1460 = vpop.f32.mrf.mxu0
      %1461 = vmatprep.mubr.bf16.mxu0 0
      %1462 = vmatmul.mubr.bf16.gmra.mxu0 %v1213
      %v1463 = vpop.f32.mrf.mxu0
      %v1464 = vadd.f32 %v1351, %v1463
      %v1465 = vpop.f32.mrf.mxu0
      %v1466 = vpop.f32.mrf.mxu0
      %v1467 = vadd.f32 %v1354, %v1466
      %v1468 = vpop.f32.mrf.mxu0
      %1469 = vmatprep.mubr.bf16.mxu0 0
      %1470 = vmatmul.mubr.bf16.gmra.mxu0 %v1214
      %v1471 = vpop.f32.mrf.mxu0
      %v1472 = vadd.f32 %v1359, %v1471
      %v1473 = vpop.f32.mrf.mxu0
      %v1474 = vpop.f32.mrf.mxu0
      %v1475 = vadd.f32 %v1362, %v1474
      %v1476 = vpop.f32.mrf.mxu0
      %1477 = vdwg.mxu0
      %v1478 = vpack.c.bf16 %v1204, %v1203
      %v1479 = vpack.c.bf16 %v1206, %v1205
      %v1480 = vpack.c.bf16 %v1208, %v1207
      %v1481 = vpack.c.bf16 %v1210, %v1209
      %s1482 = scalar_lea.vmem %s6, 128
      %v1483 = vld [vmem:[%s1482] sm:$0xf]
      %v1484 = vld [vmem:[%s1482 + $0x4] sm:$0xf]
      %v1485 = vld [vmem:[%s1482 + $0x8] sm:$0xf]
      %v1486 = vld [vmem:[%s1482 + $0xc] sm:$0xf]
      %v1487 = vld [vmem:[%s1482 + $0x10] sm:$0xf]
      %v1488 = vld [vmem:[%s1482 + $0x14] sm:$0xf]
      %v1489 = vld [vmem:[%s1482 + $0x18] sm:$0xf]
      %v1490 = vld [vmem:[%s1482 + $0x1c] sm:$0xf]
      %v1491 = vld [vmem:[%s1482 + $0x20] sm:$0xf]
      %v1492 = vld [vmem:[%s1482 + $0x24] sm:$0xf]
      %v1493 = vld [vmem:[%s1482 + $0x28] sm:$0xf]
      %v1494 = vld [vmem:[%s1482 + $0x2c] sm:$0xf]
      %v1495 = vld [vmem:[%s1482 + $0x30] sm:$0xf]
      %v1496 = vld [vmem:[%s1482 + $0x34] sm:$0xf]
      %v1497 = vld [vmem:[%s1482 + $0x38] sm:$0xf]
      %v1498 = vld [vmem:[%s1482 + $0x3c] sm:$0xf]
      %v1515 = vunpack.c.l.b16 %v1483
      %v1516 = vunpack.c.l.b16 %v1484
      %v1517 = vunpack.c.l.b16 %v1485
      %v1518 = vunpack.c.l.b16 %v1486
      %v1519 = vunpack.c.l.b16 %v1487
      %v1520 = vunpack.c.l.b16 %v1488
      %v1521 = vunpack.c.l.b16 %v1489
      %v1522 = vunpack.c.l.b16 %v1490
      %v1523 = vunpack.c.l.b16 %v1491
      %v1524 = vunpack.c.l.b16 %v1492
      %v1525 = vunpack.c.l.b16 %v1493
      %v1526 = vunpack.c.l.b16 %v1494
      %v1527 = vunpack.c.l.b16 %v1495
      %v1528 = vunpack.c.l.b16 %v1496
      %v1529 = vunpack.c.l.b16 %v1497
      %v1530 = vunpack.c.l.b16 %v1498
      %v1531 = vpack.c.b16 %v1516, %v1515
      %v1532 = vpack.c.b16 %v1518, %v1517
      %v1533 = vpack.c.b16 %v1520, %v1519
      %v1534 = vpack.c.b16 %v1522, %v1521
      %v1535 = vpack.c.b16 %v1524, %v1523
      %v1536 = vpack.c.b16 %v1526, %v1525
      %v1537 = vpack.c.b16 %v1528, %v1527
      %v1538 = vpack.c.b16 %v1530, %v1529
      %1547 = vmatprep.subr.bf16.mxu0 0
      %1548 = vmatpush1.bf16.msra.mxu0 %v1538
      %1549 = vmatprep.subr.bf16.mxu0 0
      %1550 = vmatpush1.bf16.msra.mxu0 %v1537
      %1551 = vmatprep.subr.bf16.mxu0 0
      %1552 = vmatpush1.bf16.msra.mxu0 %v1536
      %1553 = vmatprep.subr.bf16.mxu0 0
      %1554 = vmatpush1.bf16.msra.mxu0 %v1535
      %1555 = vmatprep.subr.bf16.mxu0 0
      %1556 = vmatpush1.bf16.msra.mxu0 %v1534
      %1557 = vmatprep.subr.bf16.mxu0 0
      %1558 = vmatpush1.bf16.msra.mxu0 %v1533
      %1559 = vmatprep.subr.bf16.mxu0 0
      %1560 = vmatpush1.bf16.msra.mxu0 %v1532
      %1561 = vmatprep.subr.bf16.mxu0 0
      %1562 = vmatpush1.bf16.msra.mxu0 %v1531
      %1563 = vmatprep.subr.bf16.mxu0 0
      %1564 = vmatpush2.bf16.msra.mxu0 0
      %1565 = vmatprep.subr.bf16.mxu0 0
      %1566 = vmatpush2.bf16.msra.mxu0 0
      %1567 = vmatprep.subr.bf16.mxu0 0
      %1568 = vmatpush2.bf16.msra.mxu0 0
      %1569 = vmatprep.subr.bf16.mxu0 0
      %1570 = vmatpush2.bf16.msra.mxu0 0
      %1571 = vmatprep.subr.bf16.mxu0 0
      %1572 = vmatpush2.bf16.msra.mxu0 0
      %1573 = vmatprep.subr.bf16.mxu0 0
      %1574 = vmatpush2.bf16.msra.mxu0 0
      %1575 = vmatprep.subr.bf16.mxu0 0
      %1576 = vmatpush2.bf16.msra.mxu0 0
      %1577 = vmatprep.subr.bf16.mxu0 0
      %1578 = vmatpush2.bf16.msra.mxu0 0
      %1579 = vmatprep.mubr.bf16.mxu0 0
      %1580 = vmatmul.mubr.bf16.gmra.mxu0 %v1478
      %v1581 = vpop.f32.mrf.mxu0
      %v1582 = vadd.f32 0.0, %v1581
      %v1583 = vpop.f32.mrf.mxu0
      %v1584 = vpop.f32.mrf.mxu0
      %v1585 = vadd.f32 0.0, %v1584
      %v1586 = vpop.f32.mrf.mxu0
      %1587 = vmatprep.mubr.bf16.mxu0 0
      %1588 = vmatmul.mubr.bf16.gmra.mxu0 %v1479
      %v1589 = vpop.f32.mrf.mxu0
      %v1590 = vadd.f32 0.0, %v1589
      %v1591 = vpop.f32.mrf.mxu0
      %v1592 = vpop.f32.mrf.mxu0
      %v1593 = vadd.f32 0.0, %v1592
      %v1594 = vpop.f32.mrf.mxu0
      %1595 = vmatprep.mubr.bf16.mxu0 0
      %1596 = vmatmul.mubr.bf16.gmra.mxu0 %v1480
      %v1597 = vpop.f32.mrf.mxu0
      %v1598 = vadd.f32 0.0, %v1597
      %v1599 = vpop.f32.mrf.mxu0
      %v1600 = vpop.f32.mrf.mxu0
      %v1601 = vadd.f32 0.0, %v1600
      %v1602 = vpop.f32.mrf.mxu0
      %1603 = vmatprep.mubr.bf16.mxu0 0
      %1604 = vmatmul.mubr.bf16.gmra.mxu0 %v1481
      %v1605 = vpop.f32.mrf.mxu0
      %v1606 = vadd.f32 0.0, %v1605
      %v1607 = vpop.f32.mrf.mxu0
      %v1608 = vpop.f32.mrf.mxu0
      %v1609 = vadd.f32 0.0, %v1608
      %v1610 = vpop.f32.mrf.mxu0
      %1611 = vdwg.mxu0
      %v1612 = vadd.f32 %v1448, %v1582
      %v1613 = vadd.f32 %v1451, %v1585
      %v1614 = vadd.f32 %v1456, %v1590
      %v1615 = vadd.f32 %v1459, %v1593
      %v1616 = vadd.f32 %v1464, %v1598
      %v1617 = vadd.f32 %v1467, %v1601
      %v1618 = vadd.f32 %v1472, %v1606
      %v1619 = vadd.f32 %v1475, %v1609
      %v1621 = vlaneseq
      %v1622 = vshrl.u32 %v1621, 7
      %v1623 = vsub.s32 0, %v1622
      %v1624 = vrot.slane %v1062, %v1623
      %v1626 = vadd.f32 %v1612, %v1624
      %v1627 = vadd.f32 %v1613, %v1624
      %v1628 = vadd.f32 %v1614, %v1624
      %v1629 = vadd.f32 %v1615, %v1624
      %v1630 = vadd.f32 %v1616, %v1624
      %v1631 = vadd.f32 %v1617, %v1624
      %v1632 = vadd.f32 %v1618, %v1624
      %v1633 = vadd.f32 %v1619, %v1624
      %v1634 = vld [vmem:[%s8] sm:$0x1]
      %v1635 = vld [vmem:[%s9] sm:$0x1]
      %v1636 = vadd.f32 %v1626, %v1627
      %v1637 = vrot.slane %v1636, 4
      %v1638 = vadd.f32 %v1636, %v1637
      %v1639 = vrot.slane %v1638, 2
      %v1640 = vadd.f32 %v1638, %v1639
      %v1641 = vrot.slane %v1640, 1
      %v1642 = vadd.f32 %v1640, %v1641
      %v1643 = vadd.f32 %v1628, %v1629
      %v1644 = vrot.slane %v1643, 4
      %v1645 = vadd.f32 %v1643, %v1644
      %v1646 = vrot.slane %v1645, 2
      %v1647 = vadd.f32 %v1645, %v1646
      %v1648 = vrot.slane %v1647, 1
      %v1649 = vadd.f32 %v1647, %v1648
      %v1650 = vadd.f32 %v1630, %v1631
      %v1651 = vrot.slane %v1650, 4
      %v1652 = vadd.f32 %v1650, %v1651
      %v1653 = vrot.slane %v1652, 2
      %v1654 = vadd.f32 %v1652, %v1653
      %v1655 = vrot.slane %v1654, 1
      %v1656 = vadd.f32 %v1654, %v1655
      %v1657 = vadd.f32 %v1632, %v1633
      %v1658 = vrot.slane %v1657, 4
      %v1659 = vadd.f32 %v1657, %v1658
      %v1660 = vrot.slane %v1659, 2
      %v1661 = vadd.f32 %v1659, %v1660
      %v1662 = vrot.slane %v1661, 1
      %v1663 = vadd.f32 %v1661, %v1662
      %v1668 = vsel %vm687, %v1649, %v1642
      %v1669 = vsel %vm689, %v1656, %v1668
      %v1670 = vsel %vm691, %v1663, %v1669
      %1672 = vmatprep.subr.mxu0 0.0
      %1673 = vmatpush1.msra.mxu0 %v652
      %1674 = vmatprep.subr.mxu0 0.0
      %1675 = vmatpush1.msra.mxu0 %v651
      %1676 = vmatprep.subr.mxu0 0.0
      %1677 = vmatpush1.msra.mxu0 %v650
      %1678 = vmatprep.subr.mxu0 0.0
      %1679 = vmatpush1.msra.mxu0 %v649
      %1680 = vmatprep.subr.mxu0 0.0
      %1681 = vmatpush1.msra.mxu0 %v648
      %1682 = vmatprep.subr.mxu0 0.0
      %1683 = vmatpush1.msra.mxu0 %v647
      %1684 = vmatprep.subr.mxu0 0.0
      %1685 = vmatpush1.msra.mxu0 %v646
      %1686 = vmatprep.subr.mxu0 0.0
      %1687 = vmatpush1.msra.mxu0 %v645
      %1688 = vmatprep.subr.mxu0 0.0
      %1689 = vmatpush1.msra.mxu0 %v644
      %1690 = vmatprep.subr.mxu0 0.0
      %1691 = vmatpush1.msra.mxu0 %v643
      %1692 = vmatprep.subr.mxu0 0.0
      %1693 = vmatpush1.msra.mxu0 %v642
      %1694 = vmatprep.subr.mxu0 0.0
      %1695 = vmatpush1.msra.mxu0 %v641
      %1696 = vmatprep.subr.mxu0 0.0
      %1697 = vmatpush1.msra.mxu0 %v640
      %1698 = vmatprep.subr.mxu0 0.0
      %1699 = vmatpush1.msra.mxu0 %v639
      %1700 = vmatprep.subr.mxu0 0.0
      %1701 = vmatpush1.msra.mxu0 %v638
      %1702 = vmatprep.subr.mxu0 0.0
      %1703 = vmatpush1.msra.mxu0 %v637
      %1704 = vmatprep.subr.mxu0 0.0
      %1705 = vmatpush2.msra.mxu0 0.0
      %1706 = vmatprep.subr.mxu0 0.0
      %1707 = vmatpush2.msra.mxu0 0.0
      %1708 = vmatprep.subr.mxu0 0.0
      %1709 = vmatpush2.msra.mxu0 0.0
      %1710 = vmatprep.subr.mxu0 0.0
      %1711 = vmatpush2.msra.mxu0 0.0
      %1712 = vmatprep.subr.mxu0 0.0
      %1713 = vmatpush2.msra.mxu0 0.0
      %1714 = vmatprep.subr.mxu0 0.0
      %1715 = vmatpush2.msra.mxu0 0.0
      %1716 = vmatprep.subr.mxu0 0.0
      %1717 = vmatpush2.msra.mxu0 0.0
      %1718 = vmatprep.subr.mxu0 0.0
      %1719 = vmatpush2.msra.mxu0 0.0
      %1720 = vmatprep.subr.mxu0 0.0
      %1721 = vmatpush2.msra.mxu0 0.0
      %1722 = vmatprep.subr.mxu0 0.0
      %1723 = vmatpush2.msra.mxu0 0.0
      %1724 = vmatprep.subr.mxu0 0.0
      %1725 = vmatpush2.msra.mxu0 0.0
      %1726 = vmatprep.subr.mxu0 0.0
      %1727 = vmatpush2.msra.mxu0 0.0
      %1728 = vmatprep.subr.mxu0 0.0
      %1729 = vmatpush2.msra.mxu0 0.0
      %1730 = vmatprep.subr.mxu0 0.0
      %1731 = vmatpush2.msra.mxu0 0.0
      %1732 = vmatprep.subr.mxu0 0.0
      %1733 = vmatpush2.msra.mxu0 0.0
      %1734 = vmatprep.subr.mxu0 0.0
      %1735 = vmatpush2.msra.mxu0 0.0
      %1736 = vmatprep.mubr.f32.mxu0 0.0
      %1737 = vmatmul.mubr.f32.gmra.mxu0 %v1670
      %v1738 = vpop.f32.mrf.mxu0
      %v1739 = vadd.f32 0.0, %v1738
      %v1740 = vpop.f32.mrf.mxu0
      %1741 = vdwg.mxu0
      %v1744 = vunpack.c.l.s4 1966171168
      %v1745 = vunpack.c.0.s8 %v1744
      %v1746 = vlaneseq
      %v1747 = vshrl.u32 %v1746, 7
      %v1748 = vsub.s32 %v1745, %v1747
      %v1749 = vrot.slane %v1739, %v1748
      %v1750 = vcombine.high %v1749, %v1749
      %v1752 = vunpack.c.l.s4 1966171168
      %v1753 = vunpack.c.0.s8 %v1752
      %v1754 = vlaneseq
      %v1755 = vshrl.u32 %v1754, 7
      %v1756 = vsub.s32 %v1753, %v1755
      %v1757 = vrot.slane %v1749, %v1756
      %v1759 = vunpack.c.l.s4 1966171168
      %v1760 = vunpack.c.0.s8 %v1759
      %v1761 = vlaneseq
      %v1762 = vshrl.u32 %v1761, 7
      %v1763 = vsub.s32 %v1760, %v1762
      %v1764 = vrot.slane %v1750, %v1763
      %v1765 = vcombine.high %v1757, %v1757
      %v1766 = vcombine.high %v1764, %v1764
      %v1767 = vlaneseq
      %v1768 = vshrl.u32 %v1767, 7
      %v1769 = vsub.s32 0, %v1768
      %v1770 = vrot.slane %v1757, %v1769
      %v1771 = vlaneseq
      %v1772 = vshrl.u32 %v1771, 7
      %v1773 = vsub.s32 0, %v1772
      %v1774 = vrot.slane %v1764, %v1773
      %v1775 = vlaneseq
      %v1776 = vshrl.u32 %v1775, 7
      %v1777 = vsub.s32 0, %v1776
      %v1778 = vrot.slane %v1765, %v1777
      %v1779 = vlaneseq
      %v1780 = vshrl.u32 %v1779, 7
      %v1781 = vsub.s32 0, %v1780
      %v1782 = vrot.slane %v1766, %v1781
      %v1787 = vsub.f32 %v1626, %v1770
      %v1788 = vsub.f32 %v1627, %v1770
      %v1789 = vsub.f32 %v1628, %v1774
      %v1790 = vsub.f32 %v1629, %v1774
      %v1791 = vsub.f32 %v1630, %v1778
      %v1792 = vsub.f32 %v1631, %v1778
      %v1793 = vsub.f32 %v1632, %v1782
      %v1794 = vsub.f32 %v1633, %v1782
      %v1795 = vmul.f32 %v1787, %v1787
      %v1796 = vmul.f32 %v1788, %v1788
      %v1797 = vmul.f32 %v1789, %v1789
      %v1798 = vmul.f32 %v1790, %v1790
      %v1799 = vmul.f32 %v1791, %v1791
      %v1800 = vmul.f32 %v1792, %v1792
      %v1801 = vmul.f32 %v1793, %v1793
      %v1802 = vmul.f32 %v1794, %v1794
      %v1803 = vadd.f32 %v1795, %v1796
      %v1804 = vrot.slane %v1803, 4
      %v1805 = vadd.f32 %v1803, %v1804
      %v1806 = vrot.slane %v1805, 2
      %v1807 = vadd.f32 %v1805, %v1806
      %v1808 = vrot.slane %v1807, 1
      %v1809 = vadd.f32 %v1807, %v1808
      %v1810 = vadd.f32 %v1797, %v1798
      %v1811 = vrot.slane %v1810, 4
      %v1812 = vadd.f32 %v1810, %v1811
      %v1813 = vrot.slane %v1812, 2
      %v1814 = vadd.f32 %v1812, %v1813
      %v1815 = vrot.slane %v1814, 1
      %v1816 = vadd.f32 %v1814, %v1815
      %v1817 = vadd.f32 %v1799, %v1800
      %v1818 = vrot.slane %v1817, 4
      %v1819 = vadd.f32 %v1817, %v1818
      %v1820 = vrot.slane %v1819, 2
      %v1821 = vadd.f32 %v1819, %v1820
      %v1822 = vrot.slane %v1821, 1
      %v1823 = vadd.f32 %v1821, %v1822
      %v1824 = vadd.f32 %v1801, %v1802
      %v1825 = vrot.slane %v1824, 4
      %v1826 = vadd.f32 %v1824, %v1825
      %v1827 = vrot.slane %v1826, 2
      %v1828 = vadd.f32 %v1826, %v1827
      %v1829 = vrot.slane %v1828, 1
      %v1830 = vadd.f32 %v1828, %v1829
      %v1835 = vsel %vm687, %v1816, %v1809
      %v1836 = vsel %vm689, %v1823, %v1835
      %v1837 = vsel %vm691, %v1830, %v1836
      %1839 = vmatprep.subr.mxu0 0.0
      %1840 = vmatpush1.msra.mxu0 %v652
      %1841 = vmatprep.subr.mxu0 0.0
      %1842 = vmatpush1.msra.mxu0 %v651
      %1843 = vmatprep.subr.mxu0 0.0
      %1844 = vmatpush1.msra.mxu0 %v650
      %1845 = vmatprep.subr.mxu0 0.0
      %1846 = vmatpush1.msra.mxu0 %v649
      %1847 = vmatprep.subr.mxu0 0.0
      %1848 = vmatpush1.msra.mxu0 %v648
      %1849 = vmatprep.subr.mxu0 0.0
      %1850 = vmatpush1.msra.mxu0 %v647
      %1851 = vmatprep.subr.mxu0 0.0
      %1852 = vmatpush1.msra.mxu0 %v646
      %1853 = vmatprep.subr.mxu0 0.0
      %1854 = vmatpush1.msra.mxu0 %v645
      %1855 = vmatprep.subr.mxu0 0.0
      %1856 = vmatpush1.msra.mxu0 %v644
      %1857 = vmatprep.subr.mxu0 0.0
      %1858 = vmatpush1.msra.mxu0 %v643
      %1859 = vmatprep.subr.mxu0 0.0
      %1860 = vmatpush1.msra.mxu0 %v642
      %1861 = vmatprep.subr.mxu0 0.0
      %1862 = vmatpush1.msra.mxu0 %v641
      %1863 = vmatprep.subr.mxu0 0.0
      %1864 = vmatpush1.msra.mxu0 %v640
      %1865 = vmatprep.subr.mxu0 0.0
      %1866 = vmatpush1.msra.mxu0 %v639
      %1867 = vmatprep.subr.mxu0 0.0
      %1868 = vmatpush1.msra.mxu0 %v638
      %1869 = vmatprep.subr.mxu0 0.0
      %1870 = vmatpush1.msra.mxu0 %v637
      %1871 = vmatprep.subr.mxu0 0.0
      %1872 = vmatpush2.msra.mxu0 0.0
      %1873 = vmatprep.subr.mxu0 0.0
      %1874 = vmatpush2.msra.mxu0 0.0
      %1875 = vmatprep.subr.mxu0 0.0
      %1876 = vmatpush2.msra.mxu0 0.0
      %1877 = vmatprep.subr.mxu0 0.0
      %1878 = vmatpush2.msra.mxu0 0.0
      %1879 = vmatprep.subr.mxu0 0.0
      %1880 = vmatpush2.msra.mxu0 0.0
      %1881 = vmatprep.subr.mxu0 0.0
      %1882 = vmatpush2.msra.mxu0 0.0
      %1883 = vmatprep.subr.mxu0 0.0
      %1884 = vmatpush2.msra.mxu0 0.0
      %1885 = vmatprep.subr.mxu0 0.0
      %1886 = vmatpush2.msra.mxu0 0.0
      %1887 = vmatprep.subr.mxu0 0.0
      %1888 = vmatpush2.msra.mxu0 0.0
      %1889 = vmatprep.subr.mxu0 0.0
      %1890 = vmatpush2.msra.mxu0 0.0
      %1891 = vmatprep.subr.mxu0 0.0
      %1892 = vmatpush2.msra.mxu0 0.0
      %1893 = vmatprep.subr.mxu0 0.0
      %1894 = vmatpush2.msra.mxu0 0.0
      %1895 = vmatprep.subr.mxu0 0.0
      %1896 = vmatpush2.msra.mxu0 0.0
      %1897 = vmatprep.subr.mxu0 0.0
      %1898 = vmatpush2.msra.mxu0 0.0
      %1899 = vmatprep.subr.mxu0 0.0
      %1900 = vmatpush2.msra.mxu0 0.0
      %1901 = vmatprep.subr.mxu0 0.0
      %1902 = vmatpush2.msra.mxu0 0.0
      %1903 = vmatprep.mubr.f32.mxu0 0.0
      %1904 = vmatmul.mubr.f32.gmra.mxu0 %v1837
      %v1905 = vpop.f32.mrf.mxu0
      %v1906 = vadd.f32 1e-05, %v1905
      %v1907 = vpop.f32.mrf.mxu0
      %1908 = vdwg.mxu0
      %v1909 = vrsqrt.pop %v1906
      %v1911 = vlaneseq
      %v1912 = vshrl.u32 %v1911, 7
      %v1913 = vsub.s32 0, %v1912
      %v1914 = vrot.slane %v1634, %v1913
      %v1916 = vmul.f32 %v1909, %v1914
      %v1919 = vunpack.c.l.s4 1966171168
      %v1920 = vunpack.c.0.s8 %v1919
      %v1921 = vlaneseq
      %v1922 = vshrl.u32 %v1921, 7
      %v1923 = vsub.s32 %v1920, %v1922
      %v1924 = vrot.slane %v1916, %v1923
      %v1925 = vcombine.high %v1924, %v1924
      %v1927 = vunpack.c.l.s4 1966171168
      %v1928 = vunpack.c.0.s8 %v1927
      %v1929 = vlaneseq
      %v1930 = vshrl.u32 %v1929, 7
      %v1931 = vsub.s32 %v1928, %v1930
      %v1932 = vrot.slane %v1924, %v1931
      %v1934 = vunpack.c.l.s4 1966171168
      %v1935 = vunpack.c.0.s8 %v1934
      %v1936 = vlaneseq
      %v1937 = vshrl.u32 %v1936, 7
      %v1938 = vsub.s32 %v1935, %v1937
      %v1939 = vrot.slane %v1925, %v1938
      %v1940 = vcombine.high %v1932, %v1932
      %v1941 = vcombine.high %v1939, %v1939
      %v1942 = vlaneseq
      %v1943 = vshrl.u32 %v1942, 7
      %v1944 = vsub.s32 0, %v1943
      %v1945 = vrot.slane %v1932, %v1944
      %v1946 = vlaneseq
      %v1947 = vshrl.u32 %v1946, 7
      %v1948 = vsub.s32 0, %v1947
      %v1949 = vrot.slane %v1939, %v1948
      %v1950 = vlaneseq
      %v1951 = vshrl.u32 %v1950, 7
      %v1952 = vsub.s32 0, %v1951
      %v1953 = vrot.slane %v1940, %v1952
      %v1954 = vlaneseq
      %v1955 = vshrl.u32 %v1954, 7
      %v1956 = vsub.s32 0, %v1955
      %v1957 = vrot.slane %v1941, %v1956
      %v1962 = vmul.f32 %v1787, %v1945
      %v1963 = vmul.f32 %v1788, %v1945
      %v1964 = vmul.f32 %v1789, %v1949
      %v1965 = vmul.f32 %v1790, %v1949
      %v1966 = vmul.f32 %v1791, %v1953
      %v1967 = vmul.f32 %v1792, %v1953
      %v1968 = vmul.f32 %v1793, %v1957
      %v1969 = vmul.f32 %v1794, %v1957
      %v1971 = vlaneseq
      %v1972 = vshrl.u32 %v1971, 7
      %v1973 = vsub.s32 0, %v1972
      %v1974 = vrot.slane %v1635, %v1973
      %v1976 = vadd.f32 %v1962, %v1974
      %v1977 = vadd.f32 %v1963, %v1974
      %v1978 = vadd.f32 %v1964, %v1974
      %v1979 = vadd.f32 %v1965, %v1974
      %v1980 = vadd.f32 %v1966, %v1974
      %v1981 = vadd.f32 %v1967, %v1974
      %v1982 = vadd.f32 %v1968, %v1974
      %v1983 = vadd.f32 %v1969, %v1974
      %v1984 = vxor.u32 %v1976, 2147483648
      %v1985 = vxor.u32 %v1977, 2147483648
      %v1986 = vxor.u32 %v1978, 2147483648
      %v1987 = vxor.u32 %v1979, 2147483648
      %v1988 = vxor.u32 %v1980, 2147483648
      %v1989 = vxor.u32 %v1981, 2147483648
      %v1990 = vxor.u32 %v1982, 2147483648
      %v1991 = vxor.u32 %v1983, 2147483648
      %v1992 = vmul.f32 %v1984, 1.442695
      %v1993 = vpow.pop %v1992
      %v1994 = vmul.f32 %v1985, 1.442695
      %v1995 = vpow.pop %v1994
      %v1996 = vmul.f32 %v1986, 1.442695
      %v1997 = vpow.pop %v1996
      %v1998 = vmul.f32 %v1987, 1.442695
      %v1999 = vpow.pop %v1998
      %v2000 = vmul.f32 %v1988, 1.442695
      %v2001 = vpow.pop %v2000
      %v2002 = vmul.f32 %v1989, 1.442695
      %v2003 = vpow.pop %v2002
      %v2004 = vmul.f32 %v1990, 1.442695
      %v2005 = vpow.pop %v2004
      %v2006 = vmul.f32 %v1991, 1.442695
      %v2007 = vpow.pop %v2006
      %v2008 = vadd.f32 %v1993, 1.0
      %v2009 = vadd.f32 %v1995, 1.0
      %v2010 = vadd.f32 %v1997, 1.0
      %v2011 = vadd.f32 %v1999, 1.0
      %v2012 = vadd.f32 %v2001, 1.0
      %v2013 = vadd.f32 %v2003, 1.0
      %v2014 = vadd.f32 %v2005, 1.0
      %v2015 = vadd.f32 %v2007, 1.0
      %v2016 = vrcp.pop %v2008
      %v2017 = vmul.f32 1.0, %v2016
      %v2018 = vrcp.pop %v2009
      %v2019 = vmul.f32 1.0, %v2018
      %v2020 = vrcp.pop %v2010
      %v2021 = vmul.f32 1.0, %v2020
      %v2022 = vrcp.pop %v2011
      %v2023 = vmul.f32 1.0, %v2022
      %v2024 = vrcp.pop %v2012
      %v2025 = vmul.f32 1.0, %v2024
      %v2026 = vrcp.pop %v2013
      %v2027 = vmul.f32 1.0, %v2026
      %v2028 = vrcp.pop %v2014
      %v2029 = vmul.f32 1.0, %v2028
      %v2030 = vrcp.pop %v2015
      %v2031 = vmul.f32 1.0, %v2030
      %v2032 = vmul.f32 %v1976, %v2017
      %v2033 = vmul.f32 %v1977, %v2019
      %v2034 = vmul.f32 %v1978, %v2021
      %v2035 = vmul.f32 %v1979, %v2023
      %v2036 = vmul.f32 %v1980, %v2025
      %v2037 = vmul.f32 %v1981, %v2027
      %v2038 = vmul.f32 %v1982, %v2029
      %v2039 = vmul.f32 %v1983, %v2031
      %v2040 = vld [vmem:[%s459] sm:$0x1]
      %v2041 = vld [vmem:[%s459 + $0x1] sm:$0x1]
      %v2042 = vld [vmem:[%s459 + $0x2] sm:$0x1]
      %v2043 = vld [vmem:[%s459 + $0x3] sm:$0x1]
      %v2048 = vlaneseq
      %v2049 = vshrl.u32 %v2048, 7
      %v2050 = vsub.s32 0, %v2049
      %v2051 = vrot.slane %v2040, %v2050
      %v2052 = vlaneseq
      %v2053 = vshrl.u32 %v2052, 7
      %v2054 = vsub.s32 0, %v2053
      %v2055 = vrot.slane %v2041, %v2054
      %v2056 = vlaneseq
      %v2057 = vshrl.u32 %v2056, 7
      %v2058 = vsub.s32 0, %v2057
      %v2059 = vrot.slane %v2042, %v2058
      %v2060 = vlaneseq
      %v2061 = vshrl.u32 %v2060, 7
      %v2062 = vsub.s32 0, %v2061
      %v2063 = vrot.slane %v2043, %v2062
      %v2068 = vadd.f32 %v2032, %v2051
      %v2069 = vadd.f32 %v2033, %v2051
      %v2070 = vadd.f32 %v2034, %v2055
      %v2071 = vadd.f32 %v2035, %v2055
      %v2072 = vadd.f32 %v2036, %v2059
      %v2073 = vadd.f32 %v2037, %v2059
      %v2074 = vadd.f32 %v2038, %v2063
      %v2075 = vadd.f32 %v2039, %v2063
      %2076 = vst [vmem:[%s466] sm:$0xff] %v2068
      %2077 = vst [vmem:[%s466 + $0x8] sm:$0xff] %v2069
      %2078 = vst [vmem:[%s466 + $0x10] sm:$0xff] %v2070
      %2079 = vst [vmem:[%s466 + $0x18] sm:$0xff] %v2071
      %2080 = vst [vmem:[%s466 + $0x20] sm:$0xff] %v2072
      %2081 = vst [vmem:[%s466 + $0x28] sm:$0xff] %v2073
      %2082 = vst [vmem:[%s466 + $0x30] sm:$0xff] %v2074
      %2083 = vst [vmem:[%s466 + $0x38] sm:$0xff] %v2075
      %s2084 = smul.u32 4, %s24
      %p2085 = scmp.lt.s32.totalorder %s2084, 15
      %s2086 = scalar_select %p2085, %s2084, 15
      %s2087 = smul.addr %s2086, 2
      %s2088 = smul.addr %s2087, 8
      %s2089 = scalar_lea.vmem %s13, %s2088
      // Predicated region
      $region73: #{bottleneck1d.1} parent=71 // pred_check
        %p2090 = pneg %p325
      $region74: #{bottleneck1d.1} parent=71 // pred_check_branch
        %2092 = sbr.rel (%p2090) target = $region76
      $region75: #{bottleneck1d.1} parent=71 // pred_region
        %s2093 = smul.u32 4, %s24
      $region76: #{bottleneck1d.1} parent=71 // pred_fallthru
        _
    $region72: #{bottleneck1d.1} parent=5 // pred_fallthru
      _
    %p2094 = scmp.le.s32.totalorder 2, %s19
    // Predicated region
    $region77: #{bottleneck1d.1} parent=5 // pred_check
      %p2095 = pneg %p2094
    $region78: #{bottleneck1d.1} parent=5 // pred_check_branch
      %2097 = sbr.rel (%p2095) target = $region80
    $region79: #{bottleneck1d.1} parent=5 // pred_region
      %s2098 = ssub.s32 %s19, 2
      // Predicated region
      $region81: #{bottleneck1d.1} parent=79 // pred_check
        %p2099 = pneg %p331
      $region82: #{bottleneck1d.1} parent=79 // pred_check_branch
        %2101 = sbr.rel (%p2099) target = $region84
      $region83: #{bottleneck1d.1} parent=79 // pred_region
        %s2102 = smul.u32 4, %s25
        %p2103 = scmp.lt.s32.totalorder %s2102, 15
        %s2104 = scalar_select %p2103, %s2102, 15
        %s2105 = smul.addr %s2104, 2
        %s2106 = smul.addr %s2105, 8
        %s2107 = scalar_lea.vmem %s13, %s2106
      $region84: #{bottleneck1d.1} parent=79 // pred_fallthru
        _
    $region80: #{bottleneck1d.1} parent=5 // pred_fallthru
      _
  $region6: #{bottleneck1d.1} parent=0 // loop_footer
    %s23 = sadd.s32 1, %s19
  $region7: #{bottleneck1d.1} parent=0 // loop_footer_branch
    %18 = sbr.rel target = $region3
  $region8: #{bottleneck1d.1} parent=0 // loop_exit
    _

</llo_original>
